<compile_context>
chip_gen: v7x
topology: tpu7x:2x2x1
jax: 0.10.0
libtpu: 0.0.40
codegen_flags: <defaults>
</compile_context>

<pallas_src>
import jax
import jax.numpy as jnp
from jax import lax
from jax.experimental import pallas as pl
from jax.experimental.pallas import tpu as pltpu

EPS = 1e-12          # module-level eps in DDR_fine_stn.py
GAMMA = 0.2          # CrfRnn.gamma
NUM_ITER = 5         # CrfRnn.num_iter


def _softmax_dim1(x):
    # nn.Softmax(dim=1) on a (V, L) tensor; reciprocal-multiply instead of divide.
    m = jnp.max(x, axis=1, keepdims=True)
    e = jnp.exp(x - m)
    return e * pl.reciprocal(jnp.sum(e, axis=1, keepdims=True))


def stn_kernel(def_idxs_ref, ico_ref, filt_w_ref, spat_w_ref, comp_ref,
               new_def_idxs_ref, def_cont_ico_ref, temp_def_cont_ref):
    def_idxs = def_idxs_ref[...]            # (V, L)  float32
    ico_x = ico_ref[0]                      # (V, L)  x-coordinates of labels
    ico_y = ico_ref[1]                      # (V, L)
    ico_z = ico_ref[2]                      # (V, L)
    filt_w = filt_w_ref[...]                # (V, V)
    spat_w = spat_w_ref[...]                # (V, V)
    comp = comp_ref[...]                    # (L, L)

    V = def_idxs.shape[0]

    # --- F.normalize(def_idxs, p=4, dim=1) ------------------------------
    # (sum |x|^4)^(1/4) == sqrt(sqrt(sum x^4)); avoid generic pow.
    sq = def_idxs * def_idxs
    p4 = jnp.sqrt(jnp.sqrt(jnp.sum(sq * sq, axis=1, keepdims=True)))
    def_idxs_norm = def_idxs * pl.reciprocal(jnp.maximum(p4, 1e-12))

    # --- batched matvec with label coordinates:  row v: w[v,:] @ ico[v,:,:]
    # Lane-major (V, L) planes -> VPU multiply + lane reduce per coordinate.
    def bmm_labels(w):
        return jnp.concatenate(
            [jnp.sum(w * ico_x, axis=1, keepdims=True),
             jnp.sum(w * ico_y, axis=1, keepdims=True),
             jnp.sum(w * ico_z, axis=1, keepdims=True)], axis=1)   # (V, 3)

    def l2_renorm(x):
        n = jnp.sqrt(jnp.sum(x * x, axis=1, keepdims=True))
        return x * pl.reciprocal(n + EPS)        # matches x / (norm + eps)

    temp = l2_renorm(bmm_labels(def_idxs_norm))  # (V, 3)
    temp_def_cont_ref[...] = temp

    # --- CrfRnn.forward --------------------------------------------------
    # Pairwise squared distances via the Gram trick (stays 2-D / lane-dense).
    r = jnp.sum(temp * temp, axis=1, keepdims=True)              # (V, 1)
    gram = lax.dot_general(temp, temp, (((1,), (1,)), ((), ())),
                           preferred_element_type=jnp.float32)   # (V, V)
    alpha = jnp.maximum(r + r.T - 2.0 * gram, 0.0)
    smooth = jnp.exp(alpha * (-1.0 / (2.0 * GAMMA * GAMMA)))
    # fill_diagonal_(0) via iota compare (no eye materialization)
    row = lax.broadcasted_iota(jnp.int32, (V, V), 0)
    col = lax.broadcasted_iota(jnp.int32, (V, V), 1)
    smooth = jnp.where(row == col, 0.0, smooth)
    filter_mat = filt_w * smooth

    U = jnp.log(jnp.clip(def_idxs_norm, 1e-6, 1.0))
    q = _softmax_dim1(U)

    # Hoisted out of the mean-field loop (constant across iterations):
    #   original per-iter: phi = U - ((-(spat_w @ (filter_mat @ q))) @ comp)
    #                         == U + ((spat_w @ filter_mat) @ q) @ comp
    A = jnp.dot(spat_w, filter_mat, preferred_element_type=jnp.float32)
    for _ in range(NUM_ITER):
        msg = jnp.dot(A, q, preferred_element_type=jnp.float32)       # (V, L)
        phi = U + jnp.dot(msg, comp, preferred_element_type=jnp.float32)
        q = _softmax_dim1(phi)

    new_def_idxs_ref[...] = q

    # --- def_cont_ico = bmm(new_def_idxs, icosphere_labels), renormalized
    def_cont_ico_ref[...] = l2_renorm(bmm_labels(q))


def stn_forward(def_idxs, icosphere_labels, filter_weights, spatial_weights,
                comp_matrix):
    """def_idxs: (B, V, L); icosphere_labels: (V, L, 3); CRF params shared."""
    B, V, L = def_idxs.shape
    # Lane-major label coordinates: (3, V, L) so the L-reduction sits on lanes.
    ico_planes = jnp.transpose(icosphere_labels, (2, 0, 1))

    grid_spec = pl.GridSpec(
        grid=(B,),
        in_specs=[
            pl.BlockSpec((None, V, L), lambda b: (b, 0, 0)),   # per-subject
            pl.BlockSpec((3, V, L), lambda b: (0, 0, 0)),      # shared labels
            pl.BlockSpec((V, V), lambda b: (0, 0)),            # filter_weights
            pl.BlockSpec((V, V), lambda b: (0, 0)),            # spatial_weights
            pl.BlockSpec((L, L), lambda b: (0, 0)),            # comp_matrix
        ],
        out_specs=[
            pl.BlockSpec((None, V, L), lambda b: (b, 0, 0)),   # new_def_idxs
            pl.BlockSpec((None, V, 3), lambda b: (b, 0, 0)),   # def_cont_ico
            pl.BlockSpec((None, V, 3), lambda b: (b, 0, 0)),   # temp_def_cont
        ],
    )
    out_shape = (
        jax.ShapeDtypeStruct((B, V, L), jnp.float32),  # new_def_idxs (CRF out)
        jax.ShapeDtypeStruct((B, V, 3), jnp.float32),  # def_cont_ico
        jax.ShapeDtypeStruct((B, V, 3), jnp.float32),  # temp_def_cont_ico
    )
    return pl.pallas_call(
        stn_kernel,
        out_shape=out_shape,
        grid_spec=grid_spec,
        compiler_params=pltpu.CompilerParams(
            dimension_semantics=("parallel",)),  # batch axis -> both TCs on v7x
    )(def_idxs, ico_planes, filter_weights, spatial_weights, comp_matrix)


def stn_reference(def_idxs, icosphere_labels, filter_weights, spatial_weights,
                  comp_matrix):
    """Pure-JAX replica of the PyTorch forward hot path (for verification)."""
    p4 = jnp.power(jnp.sum(def_idxs ** 4, axis=2, keepdims=True), 0.25)
    dn = def_idxs / jnp.maximum(p4, 1e-12)
    temp = jnp.einsum('bvl,vlc->bvc', dn, icosphere_labels)
    temp = temp / (jnp.linalg.norm(temp, axis=2, keepdims=True) + EPS)

    new_list, def_list = [], []
    V = def_idxs.shape[1]
    for b in range(def_idxs.shape[0]):
        t = temp[b]
        d2 = jnp.sum((t[:, None, :] - t[None, :, :]) ** 2, axis=-1)
        sm = jnp.exp(-d2 / (2.0 * GAMMA ** 2)) * (1.0 - jnp.eye(V))
        fm = filter_weights * sm
        U = jnp.log(jnp.clip(dn[b], 1e-6, 1.0))
        q = jax.nn.softmax(U, axis=1)
        for _ in range(NUM_ITER):
            phi = U + (spatial_weights @ (fm @ q)) @ comp_matrix
            q = jax.nn.softmax(phi, axis=1)
        new_list.append(q)
        dc = jnp.einsum('vl,vlc->vc', q, icosphere_labels)
        dc = dc / (jnp.linalg.norm(dc, axis=1, keepdims=True) + EPS)
        def_list.append(dc)
    return jnp.stack(new_list), jnp.stack(def_list), temp


if __name__ == "__main__":
    key = jax.random.PRNGKey(0)
    k1, k2, k3 = jax.random.split(key, 3)

    # Small shapes consistent with the module:
    #   control_ico = 0 -> control_ver = 12 ; num_labels = 8
    #   data_ico    = 1 -> data_ver    = 42 ; in_ch/2 = 4
    batch = 2            # per-subject / per-hemisphere problems in one call
    control_ver = 12
    num_labels = 8
    data_ver = 42
    feat_ch = 4
    ico_radius = 100.0

    # Network-predicted deformation indices (positive logits), one per subject.
    def_idxs = jax.random.uniform(k1, (batch, control_ver, num_labels),
                                  dtype=jnp.float32, minval=0.01, maxval=1.0)

    # Synthetic icosphere label coordinates: unit directions scaled to radius
    # (shared model buffer, same for all subjects).
    raw = jax.random.normal(k2, (control_ver, num_labels, 3), dtype=jnp.float32)
    icosphere_labels = ico_radius * raw / (
        jnp.linalg.norm(raw, axis=-1, keepdims=True) + EPS)

    # CrfRnn parameters, initialized exactly as in __init__ (deterministic).
    filter_weights = jnp.ones((control_ver, control_ver), dtype=jnp.float32)
    spatial_weights = 4.0 * jnp.eye(control_ver, dtype=jnp.float32)
    comp_matrix = jnp.eye(num_labels, dtype=jnp.float32)

    # Inputs of STN.forward that feed only the file-dependent tail
    # (kept for signature fidelity; unused by the kernel).
    moving_img = jax.random.normal(k3, (batch, data_ver, feat_ch),
                                   dtype=jnp.float32)
    coarse_warp = jnp.zeros((batch, control_ver, 3), dtype=jnp.float32)
    # TODO(synk): warped_moving_img / data_ico_warps need lat_lon_img,
    #             bilinear_sphere_resample and upsample_to_ico*.npy files.

    new_def_idxs, def_cont_ico, temp_def_cont_ico = jax.block_until_ready(
        stn_forward(def_idxs, icosphere_labels, filter_weights,
                    spatial_weights, comp_matrix))

    assert new_def_idxs.shape == (batch, control_ver, num_labels)
    assert def_cont_ico.shape == (batch, control_ver, 3)
    assert temp_def_cont_ico.shape == (batch, control_ver, 3)
    assert bool(jnp.all(jnp.isfinite(new_def_idxs)))
    assert bool(jnp.all(jnp.isfinite(def_cont_ico)))
    # CRF output rows must be a softmax (sum to 1).
    assert bool(jnp.allclose(jnp.sum(new_def_idxs, axis=-1), 1.0, atol=1e-4))
    # def_cont_ico rows are (nearly) unit vectors.
    assert bool(jnp.allclose(jnp.linalg.norm(def_cont_ico, axis=-1), 1.0,
                             atol=1e-4))

    # Cross-check against a pure-JAX reference of the PyTorch math.
    ref_new, ref_def, ref_temp = stn_reference(
        def_idxs, icosphere_labels, filter_weights, spatial_weights,
        comp_matrix)
    assert bool(jnp.allclose(new_def_idxs, ref_new, atol=2e-3, rtol=2e-3))
    assert bool(jnp.allclose(def_cont_ico, ref_def, atol=2e-3, rtol=2e-3))
    assert bool(jnp.allclose(temp_def_cont_ico, ref_temp, atol=2e-3, rtol=2e-3))

    print("KERNEL_OK")
</pallas_src>

<mosaic_0001>
module attributes {stable_mosaic.version = 11 : i64} {
  func.func @stn_kernel(%arg0: i32, %arg1: memref<1x12x8xf32, #tpu.memory_space<vmem>>, %arg2: memref<3x12x8xf32, #tpu.memory_space<vmem>>, %arg3: memref<12x12xf32, #tpu.memory_space<vmem>>, %arg4: memref<12x12xf32, #tpu.memory_space<vmem>>, %arg5: memref<8x8xf32, #tpu.memory_space<vmem>>, %arg6: memref<1x12x8xf32, #tpu.memory_space<vmem>>, %arg7: memref<1x12x3xf32, #tpu.memory_space<vmem>>, %arg8: memref<1x12x3xf32, #tpu.memory_space<vmem>>) attributes {dimension_semantics = [#tpu.dimension_semantics<parallel>], iteration_bounds = array<i64: 2>, scalar_prefetch = 0 : i64, scratch_operands = 0 : i64, tpu.core_type = #tpu.core_type<tc>, window_params = [{transform_indices = @transform_0, window_bounds = array<i64: 1, 12, 8>}, {pipeline_mode = #tpu.pipeline_mode<synchronous>, transform_indices = @transform_1, window_bounds = array<i64: 3, 12, 8>}, {pipeline_mode = #tpu.pipeline_mode<synchronous>, transform_indices = @transform_2, window_bounds = array<i64: 12, 12>}, {pipeline_mode = #tpu.pipeline_mode<synchronous>, transform_indices = @transform_3, window_bounds = array<i64: 12, 12>}, {pipeline_mode = #tpu.pipeline_mode<synchronous>, transform_indices = @transform_4, window_bounds = array<i64: 8, 8>}, {transform_indices = @transform_5, window_bounds = array<i64: 1, 12, 8>}, {transform_indices = @transform_6, window_bounds = array<i64: 1, 12, 3>}, {transform_indices = @transform_7, window_bounds = array<i64: 1, 12, 3>}]} {
    %c0 = arith.constant 0 : index
    %c0_0 = arith.constant 0 : index
    %c0_1 = arith.constant 0 : index
    %0 = vector.load %arg1[%c0, %c0_0, %c0_1] : memref<1x12x8xf32, #tpu.memory_space<vmem>>, vector<1x12x8xf32>
    %1 = vector.shape_cast %0 : vector<1x12x8xf32> to vector<12x8xf32>
    %c0_2 = arith.constant 0 : index
    %c0_3 = arith.constant 0 : index
    %c0_4 = arith.constant 0 : index
    %2 = vector.load %arg2[%c0_2, %c0_3, %c0_4] : memref<3x12x8xf32, #tpu.memory_space<vmem>>, vector<1x12x8xf32>
    %3 = vector.shape_cast %2 : vector<1x12x8xf32> to vector<12x8xf32>
    %c1 = arith.constant 1 : index
    %c0_5 = arith.constant 0 : index
    %c0_6 = arith.constant 0 : index
    %4 = vector.load %arg2[%c1, %c0_5, %c0_6] : memref<3x12x8xf32, #tpu.memory_space<vmem>>, vector<1x12x8xf32>
    %5 = vector.shape_cast %4 : vector<1x12x8xf32> to vector<12x8xf32>
    %c2 = arith.constant 2 : index
    %c0_7 = arith.constant 0 : index
    %c0_8 = arith.constant 0 : index
    %6 = vector.load %arg2[%c2, %c0_7, %c0_8] : memref<3x12x8xf32, #tpu.memory_space<vmem>>, vector<1x12x8xf32>
    %7 = vector.shape_cast %6 : vector<1x12x8xf32> to vector<12x8xf32>
    %c0_9 = arith.constant 0 : index
    %c0_10 = arith.constant 0 : index
    %8 = vector.load %arg3[%c0_9, %c0_10] : memref<12x12xf32, #tpu.memory_space<vmem>>, vector<12x12xf32>
    %c0_11 = arith.constant 0 : index
    %c0_12 = arith.constant 0 : index
    %9 = vector.load %arg4[%c0_11, %c0_12] : memref<12x12xf32, #tpu.memory_space<vmem>>, vector<12x12xf32>
    %c0_13 = arith.constant 0 : index
    %c0_14 = arith.constant 0 : index
    %10 = vector.load %arg5[%c0_13, %c0_14] : memref<8x8xf32, #tpu.memory_space<vmem>>, vector<8x8xf32>
    %11 = arith.mulf %1, %1 : vector<12x8xf32>
    %12 = arith.mulf %11, %11 : vector<12x8xf32>
    %cst = arith.constant dense<0.000000e+00> : vector<12xf32>
    %13 = vector.multi_reduction <add>, %12, %cst [1] : vector<12x8xf32> to vector<12xf32>
    %14 = vector.shape_cast %13 : vector<12xf32> to vector<12x1xf32>
    %15 = math.sqrt %14 : vector<12x1xf32>
    %16 = math.sqrt %15 : vector<12x1xf32>
    %cst_15 = arith.constant 9.99999996E-13 : f32
    %17 = vector.broadcast %cst_15 : f32 to vector<12x1xf32>
    %18 = arith.maximumf %16, %17 : vector<12x1xf32>
    %19 = tpu.reciprocal %18 : vector<12x1xf32> -> vector<12x1xf32>
    %20 = vector.broadcast %19 : vector<12x1xf32> to vector<12x8xf32>
    %21 = arith.mulf %1, %20 : vector<12x8xf32>
    %22 = arith.mulf %21, %3 : vector<12x8xf32>
    %cst_16 = arith.constant dense<0.000000e+00> : vector<12xf32>
    %23 = vector.multi_reduction <add>, %22, %cst_16 [1] : vector<12x8xf32> to vector<12xf32>
    %24 = vector.shape_cast %23 : vector<12xf32> to vector<12x1xf32>
    %25 = arith.mulf %21, %5 : vector<12x8xf32>
    %cst_17 = arith.constant dense<0.000000e+00> : vector<12xf32>
    %26 = vector.multi_reduction <add>, %25, %cst_17 [1] : vector<12x8xf32> to vector<12xf32>
    %27 = vector.shape_cast %26 : vector<12xf32> to vector<12x1xf32>
    %28 = arith.mulf %21, %7 : vector<12x8xf32>
    %cst_18 = arith.constant dense<0.000000e+00> : vector<12xf32>
    %29 = vector.multi_reduction <add>, %28, %cst_18 [1] : vector<12x8xf32> to vector<12xf32>
    %30 = vector.shape_cast %29 : vector<12xf32> to vector<12x1xf32>
    %31 = tpu.concatenate %24, %27, %30 in 1 : vector<12x1xf32>, vector<12x1xf32>, vector<12x1xf32> -> vector<12x3xf32>
    %32 = arith.mulf %31, %31 : vector<12x3xf32>
    %cst_19 = arith.constant dense<0.000000e+00> : vector<12xf32>
    %33 = vector.multi_reduction <add>, %32, %cst_19 [1] : vector<12x3xf32> to vector<12xf32>
    %34 = vector.shape_cast %33 : vector<12xf32> to vector<12x1xf32>
    %35 = math.sqrt %34 : vector<12x1xf32>
    %cst_20 = arith.constant 9.99999996E-13 : f32
    %36 = vector.broadcast %cst_20 : f32 to vector<12x1xf32>
    %37 = arith.addf %35, %36 : vector<12x1xf32>
    %38 = tpu.reciprocal %37 : vector<12x1xf32> -> vector<12x1xf32>
    %39 = vector.broadcast %38 : vector<12x1xf32> to vector<12x3xf32>
    %40 = arith.mulf %31, %39 : vector<12x3xf32>
    %c0_21 = arith.constant 0 : index
    %c0_22 = arith.constant 0 : index
    %c0_23 = arith.constant 0 : index
    %41 = vector.load %arg8[%c0_21, %c0_22, %c0_23] : memref<1x12x3xf32, #tpu.memory_space<vmem>>, vector<1x12x3xf32>
    %42 = vector.shape_cast %41 : vector<1x12x3xf32> to vector<12x3xf32>
    %43 = vector.shape_cast %40 : vector<12x3xf32> to vector<1x12x3xf32>
    tpu.vector_store %arg8[%c0_21, %c0_22, %c0_23], %43 {strides = array<i32>} : memref<1x12x3xf32, #tpu.memory_space<vmem>>, vector<1x12x3xf32>,
    %44 = arith.mulf %40, %40 : vector<12x3xf32>
    %cst_24 = arith.constant dense<0.000000e+00> : vector<12xf32>
    %45 = vector.multi_reduction <add>, %44, %cst_24 [1] : vector<12x3xf32> to vector<12xf32>
    %46 = vector.shape_cast %45 : vector<12xf32> to vector<12x1xf32>
    %cst_25 = arith.constant dense<0.000000e+00> : vector<12x12xf32>
    %47 = tpu.matmul %40, %40, %cst_25 {dimension_numbers = #tpu.dot_dimension_numbers<[1], [1], [0], [0], [0, 0, 1, 0], [], []>} : vector<12x3xf32>, vector<12x3xf32>, vector<12x12xf32> -> vector<12x12xf32>
    %48 = tpu.transpose %46, [1, 0] : vector<12x1xf32> -> vector<1x12xf32>
    %49 = vector.broadcast %46 : vector<12x1xf32> to vector<12x12xf32>
    %50 = vector.broadcast %48 : vector<1x12xf32> to vector<12x12xf32>
    %51 = arith.addf %49, %50 : vector<12x12xf32>
    %cst_26 = arith.constant 2.000000e+00 : f32
    %52 = vector.broadcast %cst_26 : f32 to vector<12x12xf32>
    %53 = arith.mulf %52, %47 : vector<12x12xf32>
    %54 = arith.subf %51, %53 : vector<12x12xf32>
    %cst_27 = arith.constant 0.000000e+00 : f32
    %55 = vector.broadcast %cst_27 : f32 to vector<12x12xf32>
    %56 = arith.maximumf %54, %55 : vector<12x12xf32>
    %cst_28 = arith.constant -1.250000e+01 : f32
    %57 = vector.broadcast %cst_28 : f32 to vector<12x12xf32>
    %58 = arith.mulf %56, %57 : vector<12x12xf32>
    %59 = math.exp %58 : vector<12x12xf32>
    %60 = tpu.iota {dimensions = array<i32: 0>} : vector<12x12xi32>
    %61 = tpu.iota {dimensions = array<i32: 1>} : vector<12x12xi32>
    %62 = arith.cmpi eq, %60, %61 : vector<12x12xi32>
    %cst_29 = arith.constant 0.000000e+00 : f32
    %63 = vector.broadcast %cst_29 : f32 to vector<12x12xf32>
    %64 = arith.select %62, %63, %59 : vector<12x12xi1>, vector<12x12xf32>
    %65 = arith.mulf %8, %64 : vector<12x12xf32>
    %cst_30 = arith.constant 9.99999997E-7 : f32
    %cst_31 = arith.constant 1.000000e+00 : f32
    %66 = vector.broadcast %cst_30 : f32 to vector<12x8xf32>
    %67 = arith.maximumf %66, %21 : vector<12x8xf32>
    %68 = vector.broadcast %cst_31 : f32 to vector<12x8xf32>
    %69 = arith.minimumf %68, %67 : vector<12x8xf32>
    %70 = math.log %69 : vector<12x8xf32>
    %cst_32 = arith.constant dense<0xFF800000> : vector<12xf32>
    %71 = vector.multi_reduction <maximumf>, %70, %cst_32 [1] : vector<12x8xf32> to vector<12xf32>
    %72 = vector.shape_cast %71 : vector<12xf32> to vector<12x1xf32>
    %73 = vector.broadcast %72 : vector<12x1xf32> to vector<12x8xf32>
    %74 = arith.subf %70, %73 : vector<12x8xf32>
    %75 = math.exp %74 : vector<12x8xf32>
    %cst_33 = arith.constant dense<0.000000e+00> : vector<12xf32>
    %76 = vector.multi_reduction <add>, %75, %cst_33 [1] : vector<12x8xf32> to vector<12xf32>
    %77 = vector.shape_cast %76 : vector<12xf32> to vector<12x1xf32>
    %78 = tpu.reciprocal %77 : vector<12x1xf32> -> vector<12x1xf32>
    %79 = vector.broadcast %78 : vector<12x1xf32> to vector<12x8xf32>
    %80 = arith.mulf %75, %79 : vector<12x8xf32>
    %cst_34 = arith.constant dense<0.000000e+00> : vector<12x12xf32>
    %81 = tpu.matmul %9, %65, %cst_34 {dimension_numbers = #tpu.dot_dimension_numbers<[1], [0], [0], [1], [0, 0, 1, 1], [], []>} : vector<12x12xf32>, vector<12x12xf32>, vector<12x12xf32> -> vector<12x12xf32>
    %cst_35 = arith.constant dense<0.000000e+00> : vector<12x8xf32>
    %82 = tpu.matmul %81, %80, %cst_35 {dimension_numbers = #tpu.dot_dimension_numbers<[1], [0], [0], [1], [0, 0, 1, 1], [], []>} : vector<12x12xf32>, vector<12x8xf32>, vector<12x8xf32> -> vector<12x8xf32>
    %cst_36 = arith.constant dense<0.000000e+00> : vector<12x8xf32>
    %83 = tpu.matmul %82, %10, %cst_36 {dimension_numbers = #tpu.dot_dimension_numbers<[1], [0], [0], [1], [0, 0, 1, 1], [], []>} : vector<12x8xf32>, vector<8x8xf32>, vector<12x8xf32> -> vector<12x8xf32>
    %84 = arith.addf %70, %83 : vector<12x8xf32>
    %cst_37 = arith.constant dense<0xFF800000> : vector<12xf32>
    %85 = vector.multi_reduction <maximumf>, %84, %cst_37 [1] : vector<12x8xf32> to vector<12xf32>
    %86 = vector.shape_cast %85 : vector<12xf32> to vector<12x1xf32>
    %87 = vector.broadcast %86 : vector<12x1xf32> to vector<12x8xf32>
    %88 = arith.subf %84, %87 : vector<12x8xf32>
    %89 = math.exp %88 : vector<12x8xf32>
    %cst_38 = arith.constant dense<0.000000e+00> : vector<12xf32>
    %90 = vector.multi_reduction <add>, %89, %cst_38 [1] : vector<12x8xf32> to vector<12xf32>
    %91 = vector.shape_cast %90 : vector<12xf32> to vector<12x1xf32>
    %92 = tpu.reciprocal %91 : vector<12x1xf32> -> vector<12x1xf32>
    %93 = vector.broadcast %92 : vector<12x1xf32> to vector<12x8xf32>
    %94 = arith.mulf %89, %93 : vector<12x8xf32>
    %cst_39 = arith.constant dense<0.000000e+00> : vector<12x8xf32>
    %95 = tpu.matmul %81, %94, %cst_39 {dimension_numbers = #tpu.dot_dimension_numbers<[1], [0], [0], [1], [0, 0, 1, 1], [], []>} : vector<12x12xf32>, vector<12x8xf32>, vector<12x8xf32> -> vector<12x8xf32>
    %cst_40 = arith.constant dense<0.000000e+00> : vector<12x8xf32>
    %96 = tpu.matmul %95, %10, %cst_40 {dimension_numbers = #tpu.dot_dimension_numbers<[1], [0], [0], [1], [0, 0, 1, 1], [], []>} : vector<12x8xf32>, vector<8x8xf32>, vector<12x8xf32> -> vector<12x8xf32>
    %97 = arith.addf %70, %96 : vector<12x8xf32>
    %cst_41 = arith.constant dense<0xFF800000> : vector<12xf32>
    %98 = vector.multi_reduction <maximumf>, %97, %cst_41 [1] : vector<12x8xf32> to vector<12xf32>
    %99 = vector.shape_cast %98 : vector<12xf32> to vector<12x1xf32>
    %100 = vector.broadcast %99 : vector<12x1xf32> to vector<12x8xf32>
    %101 = arith.subf %97, %100 : vector<12x8xf32>
    %102 = math.exp %101 : vector<12x8xf32>
    %cst_42 = arith.constant dense<0.000000e+00> : vector<12xf32>
    %103 = vector.multi_reduction <add>, %102, %cst_42 [1] : vector<12x8xf32> to vector<12xf32>
    %104 = vector.shape_cast %103 : vector<12xf32> to vector<12x1xf32>
    %105 = tpu.reciprocal %104 : vector<12x1xf32> -> vector<12x1xf32>
    %106 = vector.broadcast %105 : vector<12x1xf32> to vector<12x8xf32>
    %107 = arith.mulf %102, %106 : vector<12x8xf32>
    %cst_43 = arith.constant dense<0.000000e+00> : vector<12x8xf32>
    %108 = tpu.matmul %81, %107, %cst_43 {dimension_numbers = #tpu.dot_dimension_numbers<[1], [0], [0], [1], [0, 0, 1, 1], [], []>} : vector<12x12xf32>, vector<12x8xf32>, vector<12x8xf32> -> vector<12x8xf32>
    %cst_44 = arith.constant dense<0.000000e+00> : vector<12x8xf32>
    %109 = tpu.matmul %108, %10, %cst_44 {dimension_numbers = #tpu.dot_dimension_numbers<[1], [0], [0], [1], [0, 0, 1, 1], [], []>} : vector<12x8xf32>, vector<8x8xf32>, vector<12x8xf32> -> vector<12x8xf32>
    %110 = arith.addf %70, %109 : vector<12x8xf32>
    %cst_45 = arith.constant dense<0xFF800000> : vector<12xf32>
    %111 = vector.multi_reduction <maximumf>, %110, %cst_45 [1] : vector<12x8xf32> to vector<12xf32>
    %112 = vector.shape_cast %111 : vector<12xf32> to vector<12x1xf32>
    %113 = vector.broadcast %112 : vector<12x1xf32> to vector<12x8xf32>
    %114 = arith.subf %110, %113 : vector<12x8xf32>
    %115 = math.exp %114 : vector<12x8xf32>
    %cst_46 = arith.constant dense<0.000000e+00> : vector<12xf32>
    %116 = vector.multi_reduction <add>, %115, %cst_46 [1] : vector<12x8xf32> to vector<12xf32>
    %117 = vector.shape_cast %116 : vector<12xf32> to vector<12x1xf32>
    %118 = tpu.reciprocal %117 : vector<12x1xf32> -> vector<12x1xf32>
    %119 = vector.broadcast %118 : vector<12x1xf32> to vector<12x8xf32>
    %120 = arith.mulf %115, %119 : vector<12x8xf32>
    %cst_47 = arith.constant dense<0.000000e+00> : vector<12x8xf32>
    %121 = tpu.matmul %81, %120, %cst_47 {dimension_numbers = #tpu.dot_dimension_numbers<[1], [0], [0], [1], [0, 0, 1, 1], [], []>} : vector<12x12xf32>, vector<12x8xf32>, vector<12x8xf32> -> vector<12x8xf32>
    %cst_48 = arith.constant dense<0.000000e+00> : vector<12x8xf32>
    %122 = tpu.matmul %121, %10, %cst_48 {dimension_numbers = #tpu.dot_dimension_numbers<[1], [0], [0], [1], [0, 0, 1, 1], [], []>} : vector<12x8xf32>, vector<8x8xf32>, vector<12x8xf32> -> vector<12x8xf32>
    %123 = arith.addf %70, %122 : vector<12x8xf32>
    %cst_49 = arith.constant dense<0xFF800000> : vector<12xf32>
    %124 = vector.multi_reduction <maximumf>, %123, %cst_49 [1] : vector<12x8xf32> to vector<12xf32>
    %125 = vector.shape_cast %124 : vector<12xf32> to vector<12x1xf32>
    %126 = vector.broadcast %125 : vector<12x1xf32> to vector<12x8xf32>
    %127 = arith.subf %123, %126 : vector<12x8xf32>
    %128 = math.exp %127 : vector<12x8xf32>
    %cst_50 = arith.constant dense<0.000000e+00> : vector<12xf32>
    %129 = vector.multi_reduction <add>, %128, %cst_50 [1] : vector<12x8xf32> to vector<12xf32>
    %130 = vector.shape_cast %129 : vector<12xf32> to vector<12x1xf32>
    %131 = tpu.reciprocal %130 : vector<12x1xf32> -> vector<12x1xf32>
    %132 = vector.broadcast %131 : vector<12x1xf32> to vector<12x8xf32>
    %133 = arith.mulf %128, %132 : vector<12x8xf32>
    %cst_51 = arith.constant dense<0.000000e+00> : vector<12x8xf32>
    %134 = tpu.matmul %81, %133, %cst_51 {dimension_numbers = #tpu.dot_dimension_numbers<[1], [0], [0], [1], [0, 0, 1, 1], [], []>} : vector<12x12xf32>, vector<12x8xf32>, vector<12x8xf32> -> vector<12x8xf32>
    %cst_52 = arith.constant dense<0.000000e+00> : vector<12x8xf32>
    %135 = tpu.matmul %134, %10, %cst_52 {dimension_numbers = #tpu.dot_dimension_numbers<[1], [0], [0], [1], [0, 0, 1, 1], [], []>} : vector<12x8xf32>, vector<8x8xf32>, vector<12x8xf32> -> vector<12x8xf32>
    %136 = arith.addf %70, %135 : vector<12x8xf32>
    %cst_53 = arith.constant dense<0xFF800000> : vector<12xf32>
    %137 = vector.multi_reduction <maximumf>, %136, %cst_53 [1] : vector<12x8xf32> to vector<12xf32>
    %138 = vector.shape_cast %137 : vector<12xf32> to vector<12x1xf32>
    %139 = vector.broadcast %138 : vector<12x1xf32> to vector<12x8xf32>
    %140 = arith.subf %136, %139 : vector<12x8xf32>
    %141 = math.exp %140 : vector<12x8xf32>
    %cst_54 = arith.constant dense<0.000000e+00> : vector<12xf32>
    %142 = vector.multi_reduction <add>, %141, %cst_54 [1] : vector<12x8xf32> to vector<12xf32>
    %143 = vector.shape_cast %142 : vector<12xf32> to vector<12x1xf32>
    %144 = tpu.reciprocal %143 : vector<12x1xf32> -> vector<12x1xf32>
    %145 = vector.broadcast %144 : vector<12x1xf32> to vector<12x8xf32>
    %146 = arith.mulf %141, %145 : vector<12x8xf32>
    %c0_55 = arith.constant 0 : index
    %c0_56 = arith.constant 0 : index
    %c0_57 = arith.constant 0 : index
    %147 = vector.load %arg6[%c0_55, %c0_56, %c0_57] : memref<1x12x8xf32, #tpu.memory_space<vmem>>, vector<1x12x8xf32>
    %148 = vector.shape_cast %147 : vector<1x12x8xf32> to vector<12x8xf32>
    %149 = vector.shape_cast %146 : vector<12x8xf32> to vector<1x12x8xf32>
    tpu.vector_store %arg6[%c0_55, %c0_56, %c0_57], %149 {strides = array<i32>} : memref<1x12x8xf32, #tpu.memory_space<vmem>>, vector<1x12x8xf32>,
    %150 = arith.mulf %146, %3 : vector<12x8xf32>
    %cst_58 = arith.constant dense<0.000000e+00> : vector<12xf32>
    %151 = vector.multi_reduction <add>, %150, %cst_58 [1] : vector<12x8xf32> to vector<12xf32>
    %152 = vector.shape_cast %151 : vector<12xf32> to vector<12x1xf32>
    %153 = arith.mulf %146, %5 : vector<12x8xf32>
    %cst_59 = arith.constant dense<0.000000e+00> : vector<12xf32>
    %154 = vector.multi_reduction <add>, %153, %cst_59 [1] : vector<12x8xf32> to vector<12xf32>
    %155 = vector.shape_cast %154 : vector<12xf32> to vector<12x1xf32>
    %156 = arith.mulf %146, %7 : vector<12x8xf32>
    %cst_60 = arith.constant dense<0.000000e+00> : vector<12xf32>
    %157 = vector.multi_reduction <add>, %156, %cst_60 [1] : vector<12x8xf32> to vector<12xf32>
    %158 = vector.shape_cast %157 : vector<12xf32> to vector<12x1xf32>
    %159 = tpu.concatenate %152, %155, %158 in 1 : vector<12x1xf32>, vector<12x1xf32>, vector<12x1xf32> -> vector<12x3xf32>
    %160 = arith.mulf %159, %159 : vector<12x3xf32>
    %cst_61 = arith.constant dense<0.000000e+00> : vector<12xf32>
    %161 = vector.multi_reduction <add>, %160, %cst_61 [1] : vector<12x3xf32> to vector<12xf32>
    %162 = vector.shape_cast %161 : vector<12xf32> to vector<12x1xf32>
    %163 = math.sqrt %162 : vector<12x1xf32>
    %cst_62 = arith.constant 9.99999996E-13 : f32
    %164 = vector.broadcast %cst_62 : f32 to vector<12x1xf32>
    %165 = arith.addf %163, %164 : vector<12x1xf32>
    %166 = tpu.reciprocal %165 : vector<12x1xf32> -> vector<12x1xf32>
    %167 = vector.broadcast %166 : vector<12x1xf32> to vector<12x3xf32>
    %168 = arith.mulf %159, %167 : vector<12x3xf32>
    %c0_63 = arith.constant 0 : index
    %c0_64 = arith.constant 0 : index
    %c0_65 = arith.constant 0 : index
    %169 = vector.load %arg7[%c0_63, %c0_64, %c0_65] : memref<1x12x3xf32, #tpu.memory_space<vmem>>, vector<1x12x3xf32>
    %170 = vector.shape_cast %169 : vector<1x12x3xf32> to vector<12x3xf32>
    %171 = vector.shape_cast %168 : vector<12x3xf32> to vector<1x12x3xf32>
    tpu.vector_store %arg7[%c0_63, %c0_64, %c0_65], %171 {strides = array<i32>} : memref<1x12x3xf32, #tpu.memory_space<vmem>>, vector<1x12x3xf32>,
    return
  }
  func.func @transform_0(%arg0: i32) -> (i32, i32, i32) {
    %c0_i32 = arith.constant 0 : i32
    %c0_i32_0 = arith.constant 0 : i32
    %c0_i32_1 = arith.constant 0 : i32
    return %arg0, %c0_i32, %c0_i32_0 : i32, i32, i32
  }
  func.func @transform_1(%arg0: i32) -> (i32, i32, i32) {
    %c0_i32 = arith.constant 0 : i32
    %c0_i32_0 = arith.constant 0 : i32
    %c0_i32_1 = arith.constant 0 : i32
    %c0_i32_2 = arith.constant 0 : i32
    return %c0_i32, %c0_i32_0, %c0_i32_1 : i32, i32, i32
  }
  func.func @transform_2(%arg0: i32) -> (i32, i32) {
    %c0_i32 = arith.constant 0 : i32
    %c0_i32_0 = arith.constant 0 : i32
    %c0_i32_1 = arith.constant 0 : i32
    return %c0_i32, %c0_i32_0 : i32, i32
  }
  func.func @transform_3(%arg0: i32) -> (i32, i32) {
    %c0_i32 = arith.constant 0 : i32
    %c0_i32_0 = arith.constant 0 : i32
    %c0_i32_1 = arith.constant 0 : i32
    return %c0_i32, %c0_i32_0 : i32, i32
  }
  func.func @transform_4(%arg0: i32) -> (i32, i32) {
    %c0_i32 = arith.constant 0 : i32
    %c0_i32_0 = arith.constant 0 : i32
    %c0_i32_1 = arith.constant 0 : i32
    return %c0_i32, %c0_i32_0 : i32, i32
  }
  func.func @transform_5(%arg0: i32) -> (i32, i32, i32) {
    %c0_i32 = arith.constant 0 : i32
    %c0_i32_0 = arith.constant 0 : i32
    %c0_i32_1 = arith.constant 0 : i32
    return %arg0, %c0_i32, %c0_i32_0 : i32, i32, i32
  }
  func.func @transform_6(%arg0: i32) -> (i32, i32, i32) {
    %c0_i32 = arith.constant 0 : i32
    %c0_i32_0 = arith.constant 0 : i32
    %c0_i32_1 = arith.constant 0 : i32
    return %arg0, %c0_i32, %c0_i32_0 : i32, i32, i32
  }
  func.func @transform_7(%arg0: i32) -> (i32, i32, i32) {
    %c0_i32 = arith.constant 0 : i32
    %c0_i32_0 = arith.constant 0 : i32
    %c0_i32_1 = arith.constant 0 : i32
    return %arg0, %c0_i32, %c0_i32_0 : i32, i32, i32
  }
}

</mosaic_0001>

<llo_original>
// kernel: tpu_custom_call.1
$region0: #{tpu_custom_call.1}
  #allocation0 [shape = 'u32[]', space=smem, size = 0x4, offset = 0x4, fixed_abs, tag = 'smem constant byte address 0x4 - core index']
  #allocation1 [shape = 'u32[144,128]{1,0:T(1,128)}', space=vmem, size = 0x12000, scoped, tag = 'internal scratch']
  %s0 = inlined_call_operand.vmem [shape: f32[2,12,8], index: 0, kind: input, shape index: {}]
  %s1 = inlined_call_operand.vmem [shape: f32[3,12,8], index: 1, kind: input, shape index: {}]
  %s2 = inlined_call_operand.vmem [shape: f32[12,12], index: 2, kind: input, shape index: {}]
  %s3 = inlined_call_operand.vmem [shape: f32[12,12], index: 3, kind: input, shape index: {}]
  %s4 = inlined_call_operand.vmem [shape: f32[8,8], index: 4, kind: input, shape index: {}]
  %s5 = inlined_call_operand.vmem [shape: f32[2,12,8], index: 5, kind: output, shape index: {0}]
  %s6 = inlined_call_operand.vmem [shape: f32[2,12,3], index: 6, kind: output, shape index: {1}]
  %s7 = inlined_call_operand.vmem [shape: f32[2,12,3], index: 7, kind: output, shape index: {2}]
  %8 = xla_tuple %s5, %s6, %s7
  %s9 = sld [smem:[#allocation0]]
  $region69: #{tpu_custom_call.1} parent=0
    _
  %s11 = ssub.s32 1, %s9
  %s12 = scalar_select 0, %s11, %s9
  loop: start=0, step=1, limit=4
  $region2: #{tpu_custom_call.1} parent=0 // loop_pre_header
    _
  $region3: #{tpu_custom_call.1} parent=0 // loop_header
    %s14 = sphi 0, %s18
    %p15 = scmp.ge.s32.totalorder %s14, 4
    %s24 = sphi 0, %s26
    %s27 = sphi 0, %s24
    %s28 = sphi 0, %s27
    %s44 = sphi 0, %s28
    %s48 = sphi 0, %s48
    %s50 = sphi 0, %s48
    %s51 = sphi 0, %s50
    %s65 = sphi 0, %s51
    %s69 = sphi 0, %s69
    %s71 = sphi 0, %s69
    %s72 = sphi 0, %s71
    %s86 = sphi 0, %s72
    %s90 = sphi 0, %s90
    %s92 = sphi 0, %s90
    %s93 = sphi 0, %s92
    %s107 = sphi 0, %s93
    %s111 = sphi 0, %s111
    %s113 = sphi 0, %s111
    %s114 = sphi 0, %s113
    %s128 = sphi 0, %s114
    %s134 = sphi 0, %s136
    %s137 = sphi 0, %s134
    %s138 = sphi 0, %s137
    %s154 = sphi 0, %s138
    %s160 = sphi 0, %s162
    %s163 = sphi 0, %s160
    %s164 = sphi 0, %s163
    %s180 = sphi 0, %s164
    %s186 = sphi 0, %s188
    %s189 = sphi 0, %s186
    %s190 = sphi 0, %s189
    %s206 = sphi 0, %s190
  $region4: #{tpu_custom_call.1} parent=0 // loop_header_branch
    %17 = sbr.rel (%p15) target = $region8
  $region5: #{tpu_custom_call.1} parent=0 // loop_body
    %s19 = ssub.s32 %s14, 1
    %s20 = ssub.s32 %s14, 2
    %s21 = sadd.s32 %s14, 1
    %s22 = ssub.s32 %s14, %s21
    %p23 = scmp.eq.s32.totalorder %s22, 0
    %s25 = sadd.s32 %s24, 1
    %s26 = scalar_select %p23, %s24, %s25
    %p29 = pneg %p23
    %p30 = scmp.eq.s32.totalorder %s14, 1
    %p31 = por %p29, %p30
    %p32 = scmp.ne.s32.totalorder %s24, %s27
    %p33 = scmp.eq.s32.totalorder %s14, 0
    %p34 = por %p32, %p33
    %p35 = scmp.ne.s32.totalorder %s24, %s27
    %p36 = scmp.eq.s32.totalorder %s19, 1
    %p37 = por %p35, %p36
    %p38 = scmp.ne.s32.totalorder %s27, %s28
    %p39 = scmp.eq.s32.totalorder %s19, 0
    %p40 = por %p38, %p39
    %p41 = scmp.ne.s32.totalorder %s27, %s28
    %p42 = scmp.eq.s32.totalorder %s20, 1
    %p43 = por %p41, %p42
    %p45 = scmp.ne.s32.totalorder %s28, %s44
    %p46 = scmp.eq.s32.totalorder %s20, 0
    %p47 = por %p45, %p46
    %s49 = sadd.s32 %s48, 1
    %p52 = scmp.eq.s32.totalorder %s14, 1
    %p53 = scmp.ne.s32.totalorder %s48, %s50
    %p54 = scmp.eq.s32.totalorder %s14, 0
    %p55 = por %p53, %p54
    %p56 = scmp.ne.s32.totalorder %s48, %s50
    %p57 = scmp.eq.s32.totalorder %s19, 1
    %p58 = por %p56, %p57
    %p59 = scmp.ne.s32.totalorder %s50, %s51
    %p60 = scmp.eq.s32.totalorder %s19, 0
    %p61 = por %p59, %p60
    %p62 = scmp.ne.s32.totalorder %s50, %s51
    %p63 = scmp.eq.s32.totalorder %s20, 1
    %p64 = por %p62, %p63
    %p66 = scmp.ne.s32.totalorder %s51, %s65
    %p67 = scmp.eq.s32.totalorder %s20, 0
    %p68 = por %p66, %p67
    %s70 = sadd.s32 %s69, 1
    %p73 = scmp.eq.s32.totalorder %s14, 1
    %p74 = scmp.ne.s32.totalorder %s69, %s71
    %p75 = scmp.eq.s32.totalorder %s14, 0
    %p76 = por %p74, %p75
    %p77 = scmp.ne.s32.totalorder %s69, %s71
    %p78 = scmp.eq.s32.totalorder %s19, 1
    %p79 = por %p77, %p78
    %p80 = scmp.ne.s32.totalorder %s71, %s72
    %p81 = scmp.eq.s32.totalorder %s19, 0
    %p82 = por %p80, %p81
    %p83 = scmp.ne.s32.totalorder %s71, %s72
    %p84 = scmp.eq.s32.totalorder %s20, 1
    %p85 = por %p83, %p84
    %p87 = scmp.ne.s32.totalorder %s72, %s86
    %p88 = scmp.eq.s32.totalorder %s20, 0
    %p89 = por %p87, %p88
    %s91 = sadd.s32 %s90, 1
    %p94 = scmp.eq.s32.totalorder %s14, 1
    %p95 = scmp.ne.s32.totalorder %s90, %s92
    %p96 = scmp.eq.s32.totalorder %s14, 0
    %p97 = por %p95, %p96
    %p98 = scmp.ne.s32.totalorder %s90, %s92
    %p99 = scmp.eq.s32.totalorder %s19, 1
    %p100 = por %p98, %p99
    %p101 = scmp.ne.s32.totalorder %s92, %s93
    %p102 = scmp.eq.s32.totalorder %s19, 0
    %p103 = por %p101, %p102
    %p104 = scmp.ne.s32.totalorder %s92, %s93
    %p105 = scmp.eq.s32.totalorder %s20, 1
    %p106 = por %p104, %p105
    %p108 = scmp.ne.s32.totalorder %s93, %s107
    %p109 = scmp.eq.s32.totalorder %s20, 0
    %p110 = por %p108, %p109
    %s112 = sadd.s32 %s111, 1
    %p115 = scmp.eq.s32.totalorder %s14, 1
    %p116 = scmp.ne.s32.totalorder %s111, %s113
    %p117 = scmp.eq.s32.totalorder %s14, 0
    %p118 = por %p116, %p117
    %p119 = scmp.ne.s32.totalorder %s111, %s113
    %p120 = scmp.eq.s32.totalorder %s19, 1
    %p121 = por %p119, %p120
    %p122 = scmp.ne.s32.totalorder %s113, %s114
    %p123 = scmp.eq.s32.totalorder %s19, 0
    %p124 = por %p122, %p123
    %p125 = scmp.ne.s32.totalorder %s113, %s114
    %p126 = scmp.eq.s32.totalorder %s20, 1
    %p127 = por %p125, %p126
    %p129 = scmp.ne.s32.totalorder %s114, %s128
    %p130 = scmp.eq.s32.totalorder %s20, 0
    %p131 = por %p129, %p130
    %s132 = ssub.s32 %s14, %s21
    %p133 = scmp.eq.s32.totalorder %s132, 0
    %s135 = sadd.s32 %s134, 1
    %s136 = scalar_select %p133, %s134, %s135
    %p139 = pneg %p133
    %p140 = scmp.eq.s32.totalorder %s14, 1
    %p141 = por %p139, %p140
    %p142 = scmp.ne.s32.totalorder %s134, %s137
    %p143 = scmp.eq.s32.totalorder %s14, 0
    %p144 = por %p142, %p143
    %p145 = scmp.ne.s32.totalorder %s134, %s137
    %p146 = scmp.eq.s32.totalorder %s19, 1
    %p147 = por %p145, %p146
    %p148 = scmp.ne.s32.totalorder %s137, %s138
    %p149 = scmp.eq.s32.totalorder %s19, 0
    %p150 = por %p148, %p149
    %p151 = scmp.ne.s32.totalorder %s137, %s138
    %p152 = scmp.eq.s32.totalorder %s20, 1
    %p153 = por %p151, %p152
    %p155 = scmp.ne.s32.totalorder %s138, %s154
    %p156 = scmp.eq.s32.totalorder %s20, 0
    %p157 = por %p155, %p156
    %s158 = ssub.s32 %s14, %s21
    %p159 = scmp.eq.s32.totalorder %s158, 0
    %s161 = sadd.s32 %s160, 1
    %s162 = scalar_select %p159, %s160, %s161
    %p165 = pneg %p159
    %p166 = scmp.eq.s32.totalorder %s14, 1
    %p167 = por %p165, %p166
    %p168 = scmp.ne.s32.totalorder %s160, %s163
    %p169 = scmp.eq.s32.totalorder %s14, 0
    %p170 = por %p168, %p169
    %p171 = scmp.ne.s32.totalorder %s160, %s163
    %p172 = scmp.eq.s32.totalorder %s19, 1
    %p173 = por %p171, %p172
    %p174 = scmp.ne.s32.totalorder %s163, %s164
    %p175 = scmp.eq.s32.totalorder %s19, 0
    %p176 = por %p174, %p175
    %p177 = scmp.ne.s32.totalorder %s163, %s164
    %p178 = scmp.eq.s32.totalorder %s20, 1
    %p179 = por %p177, %p178
    %p181 = scmp.ne.s32.totalorder %s164, %s180
    %p182 = scmp.eq.s32.totalorder %s20, 0
    %p183 = por %p181, %p182
    %s184 = ssub.s32 %s14, %s21
    %p185 = scmp.eq.s32.totalorder %s184, 0
    %s187 = sadd.s32 %s186, 1
    %s188 = scalar_select %p185, %s186, %s187
    %p191 = pneg %p185
    %p192 = scmp.eq.s32.totalorder %s14, 1
    %p193 = por %p191, %p192
    %p194 = scmp.ne.s32.totalorder %s186, %s189
    %p195 = scmp.eq.s32.totalorder %s14, 0
    %p196 = por %p194, %p195
    %p197 = scmp.ne.s32.totalorder %s186, %s189
    %p198 = scmp.eq.s32.totalorder %s19, 1
    %p199 = por %p197, %p198
    %p200 = scmp.ne.s32.totalorder %s189, %s190
    %p201 = scmp.eq.s32.totalorder %s19, 0
    %p202 = por %p200, %p201
    %p203 = scmp.ne.s32.totalorder %s189, %s190
    %p204 = scmp.eq.s32.totalorder %s20, 1
    %p205 = por %p203, %p204
    %p207 = scmp.ne.s32.totalorder %s190, %s206
    %p208 = scmp.eq.s32.totalorder %s20, 0
    %p209 = por %p207, %p208
    %p210 = scmp.le.s32.totalorder 1, %s14
    %p211 = scmp.lt.s32.totalorder %s14, 3
    %p212 = pnand %p210, %p211
    %p213 = pneg %p212
    // Predicated region
    $region9: #{tpu_custom_call.1} parent=5 // pred_check
      _
    $region10: #{tpu_custom_call.1} parent=5 // pred_check_branch
      %215 = sbr.rel (%p212) target = $region12
    $region11: #{tpu_custom_call.1} parent=5 // pred_region
      %s216 = ssub.s32 %s14, 1
      // Predicated region
      $region13: #{tpu_custom_call.1} parent=11 // pred_check
        %p217 = pneg %p61
      $region14: #{tpu_custom_call.1} parent=11 // pred_check_branch
        %219 = sbr.rel (%p217) target = $region16
      $region15: #{tpu_custom_call.1} parent=11 // pred_region
        _
      $region16: #{tpu_custom_call.1} parent=11 // pred_fallthru
        _
      // Predicated region
      $region17: #{tpu_custom_call.1} parent=11 // pred_check
        %p220 = pneg %p82
      $region18: #{tpu_custom_call.1} parent=11 // pred_check_branch
        %222 = sbr.rel (%p220) target = $region20
      $region19: #{tpu_custom_call.1} parent=11 // pred_region
        _
      $region20: #{tpu_custom_call.1} parent=11 // pred_fallthru
        _
      // Predicated region
      $region21: #{tpu_custom_call.1} parent=11 // pred_check
        %p223 = pneg %p103
      $region22: #{tpu_custom_call.1} parent=11 // pred_check_branch
        %225 = sbr.rel (%p223) target = $region24
      $region23: #{tpu_custom_call.1} parent=11 // pred_region
        _
      $region24: #{tpu_custom_call.1} parent=11 // pred_fallthru
        _
      // Predicated region
      $region25: #{tpu_custom_call.1} parent=11 // pred_check
        %p226 = pneg %p124
      $region26: #{tpu_custom_call.1} parent=11 // pred_check_branch
        %228 = sbr.rel (%p226) target = $region28
      $region27: #{tpu_custom_call.1} parent=11 // pred_region
        _
      $region28: #{tpu_custom_call.1} parent=11 // pred_fallthru
        _
    $region12: #{tpu_custom_call.1} parent=5 // pred_fallthru
      _
    %p229 = scmp.lt.s32.totalorder %s14, 2
    // Predicated region
    $region29: #{tpu_custom_call.1} parent=5 // pred_check
      %p230 = pneg %p229
    $region30: #{tpu_custom_call.1} parent=5 // pred_check_branch
      %232 = sbr.rel (%p230) target = $region32
    $region31: #{tpu_custom_call.1} parent=5 // pred_region
      // Predicated region
      $region33: #{tpu_custom_call.1} parent=31 // pred_check
        %p233 = pneg %p34
      $region34: #{tpu_custom_call.1} parent=31 // pred_check_branch
        %235 = sbr.rel (%p233) target = $region36
      $region35: #{tpu_custom_call.1} parent=31 // pred_region
        %p236 = scmp.lt.s32.totalorder %s14, 1
        %s237 = scalar_select %p236, %s14, 1
        %s238 = smul.addr %s237, 2
        %s239 = smul.addr %s238, 8
        %s240 = scalar_lea.vmem %s0, %s239
      $region36: #{tpu_custom_call.1} parent=31 // pred_fallthru
        _
    $region32: #{tpu_custom_call.1} parent=5 // pred_fallthru
      _
    %p241 = scmp.le.s32.totalorder 1, %s14
    %p242 = scmp.lt.s32.totalorder %s14, 3
    %p243 = pnand %p241, %p242
    %p244 = pneg %p243
    // Predicated region
    $region37: #{tpu_custom_call.1} parent=5 // pred_check
      _
    $region38: #{tpu_custom_call.1} parent=5 // pred_check_branch
      %246 = sbr.rel (%p243) target = $region40
    $region39: #{tpu_custom_call.1} parent=5 // pred_region
      %s247 = ssub.s32 %s14, 1
      %p248 = scmp.lt.s32.totalorder %s19, 1
      %s249 = scalar_select %p248, %s19, 1
      %s250 = smul.addr %s249, 2
      %s251 = smul.addr %s250, 8
      %s252 = scalar_lea.vmem %s0, %s251
      %p253 = pneg %p40
      %p254 = pneg %p37
      %p255 = pneg %p61
      %p256 = pneg %p58
      %p257 = pneg %p82
      %p258 = pneg %p79
      %p259 = pneg %p103
      %p260 = pneg %p100
      %p261 = pneg %p124
      %p262 = pneg %p121
      %p263 = pneg %p150
      %p264 = pneg %p147
      %p265 = scmp.lt.s32.totalorder %s19, 1
      %s266 = scalar_select %p265, %s19, 1
      %s267 = smul.addr %s266, 2
      %s268 = smul.addr %s267, 8
      %s269 = scalar_lea.vmem %s5, %s268
      %p270 = pneg %p176
      %p271 = pneg %p173
      %p272 = scmp.lt.s32.totalorder %s19, 1
      %s273 = scalar_select %p272, %s19, 1
      %s274 = smul.addr %s273, 2
      %s275 = smul.addr %s274, 8
      %s276 = scalar_lea.vmem %s6, %s275
      %p277 = pneg %p202
      %p278 = pneg %p199
      %p279 = scmp.lt.s32.totalorder %s19, 1
      %s280 = scalar_select %p279, %s19, 1
      %s281 = smul.addr %s280, 2
      %s282 = smul.addr %s281, 8
      %s283 = scalar_lea.vmem %s7, %s282
      %p284 = scmp.lt.s32.totalorder %s19, 1
      %s285 = scalar_select %p284, %s19, 1
      %s286 = smul.addr %s285, 2
      %s287 = smul.addr %s286, 8
      %s288 = scalar_lea.vmem %s0, %s287
      %p289 = scmp.lt.s32.totalorder %s19, 1
      %s290 = scalar_select %p289, %s19, 1
      %s291 = smul.addr %s290, 2
      %s292 = smul.addr %s291, 8
      %s293 = scalar_lea.vmem %s5, %s292
      %p294 = scmp.lt.s32.totalorder %s19, 1
      %s295 = scalar_select %p294, %s19, 1
      %s296 = smul.addr %s295, 2
      %s297 = smul.addr %s296, 8
      %s298 = scalar_lea.vmem %s6, %s297
      %p299 = scmp.lt.s32.totalorder %s19, 1
      %s300 = scalar_select %p299, %s19, 1
      %s301 = smul.addr %s300, 2
      %s302 = smul.addr %s301, 8
      %s303 = scalar_lea.vmem %s7, %s302
      %v304 = vld [vmem:[%s288] sm:$0xff]
      %v305 = vld [vmem:[%s288 + $0x8] sm:$0xf]
      %v306 = vld [vmem:[%s1] sm:$0xff]
      %v307 = vld [vmem:[%s1 + $0x8] sm:$0xf]
      %s308 = scalar_lea.vmem %s1, 16
      %v309 = vld [vmem:[%s308] sm:$0xff]
      %v310 = vld [vmem:[%s308 + $0x8] sm:$0xf]
      %s311 = scalar_lea.vmem %s1, 32
      %v312 = vld [vmem:[%s311] sm:$0xff]
      %v313 = vld [vmem:[%s311 + $0x8] sm:$0xf]
      %v314 = vld [vmem:[%s2] sm:$0xff]
      %v315 = vld [vmem:[%s2 + $0x8] sm:$0xf]
      %v316 = vld [vmem:[%s3] sm:$0xff]
      %v317 = vld [vmem:[%s3 + $0x8] sm:$0xf]
      %v318 = vld [vmem:[%s4] sm:$0xff]
      %v319 = vmul.f32 %v304, %v304
      %v320 = vmul.f32 %v305, %v305
      %v321 = vmul.f32 %v319, %v319
      %v322 = vmul.f32 %v320, %v320
      %vm323 = vcmask 64512
      %v324 = vsel %vm323, %v321, 0.0
      %325 = vadd.xlane.f32.xlu0 %v324
      %v326 = vpop.xlane.xlu0 %325
      %vm327 = vcmask 60416
      %v328 = vsel %vm327, %v322, 0.0
      %329 = vadd.xlane.f32.xlu0 %v328
      %v330 = vpop.xlane.xlu0 %329
      %v331 = vrsqrt.pop %v326
      %v332 = vmul.f32 %v326, %v331
      %vm333 = vcmp.eq.f32.partialorder %v326, inf
      %v334 = vsel %vm333, %v326, %v332
      %vm335 = vcmp.eq.f32.partialorder %v326, 0.0
      %v336 = vand.u32 %v326, 2147483648
      %v337 = vsel %vm335, %v336, %v334
      %v338 = vrsqrt.pop %v330
      %v339 = vmul.f32 %v330, %v338
      %vm340 = vcmp.eq.f32.partialorder %v330, inf
      %v341 = vsel %vm340, %v330, %v339
      %vm342 = vcmp.eq.f32.partialorder %v330, 0.0
      %v343 = vand.u32 %v330, 2147483648
      %v344 = vsel %vm342, %v343, %v341
      %v345 = vrsqrt.pop %v337
      %v346 = vmul.f32 %v337, %v345
      %vm347 = vcmp.eq.f32.partialorder %v337, inf
      %v348 = vsel %vm347, %v337, %v346
      %vm349 = vcmp.eq.f32.partialorder %v337, 0.0
      %v350 = vand.u32 %v337, 2147483648
      %v351 = vsel %vm349, %v350, %v348
      %v352 = vrsqrt.pop %v344
      %v353 = vmul.f32 %v344, %v352
      %vm354 = vcmp.eq.f32.partialorder %v344, inf
      %v355 = vsel %vm354, %v344, %v353
      %vm356 = vcmp.eq.f32.partialorder %v344, 0.0
      %v357 = vand.u32 %v344, 2147483648
      %v358 = vsel %vm356, %v357, %v355
      %v359 = vmax.f32 %v351, 1e-12
      %v360 = vmax.f32 %v358, 1e-12
      %v361 = vrcp.pop %v359
      %v362 = vrcp.pop %v360
      %v363 = vmul.f32 %v304, %v361
      %v364 = vmul.f32 %v305, %v362
      %v365 = vmul.f32 %v363, %v306
      %v366 = vmul.f32 %v364, %v307
      %v367 = vsel %vm323, %v365, 0.0
      %368 = vadd.xlane.f32.xlu0 %v367
      %v369 = vpop.xlane.xlu0 %368
      %v370 = vsel %vm327, %v366, 0.0
      %371 = vadd.xlane.f32.xlu0 %v370
      %v372 = vpop.xlane.xlu0 %371
      %v373 = vmul.f32 %v363, %v309
      %v374 = vmul.f32 %v364, %v310
      %v375 = vsel %vm323, %v373, 0.0
      %376 = vadd.xlane.f32.xlu0 %v375
      %v377 = vpop.xlane.xlu0 %376
      %v378 = vsel %vm327, %v374, 0.0
      %379 = vadd.xlane.f32.xlu0 %v378
      %v380 = vpop.xlane.xlu0 %379
      %v381 = vmul.f32 %v363, %v312
      %v382 = vmul.f32 %v364, %v313
      %v383 = vsel %vm323, %v381, 0.0
      %384 = vadd.xlane.f32.xlu0 %v383
      %v385 = vpop.xlane.xlu0 %384
      %v386 = vsel %vm327, %v382, 0.0
      %387 = vadd.xlane.f32.xlu0 %v386
      %v388 = vpop.xlane.xlu0 %387
      %vm389 = vcmask 7168
      %v390 = vsel %vm389, %v369, %v377
      %v391 = vsel %vm389, %v372, %v380
      %vm392 = vcmask 15360
      %v393 = vsel %vm392, %v390, %v385
      %v394 = vsel %vm392, %v391, %v388
      %v395 = vmul.f32 %v393, %v393
      %v396 = vmul.f32 %v394, %v394
      %vm397 = vcmask 23552
      %v398 = vsel %vm397, %v395, 0.0
      %399 = vadd.xlane.f32.xlu0 %v398
      %v400 = vpop.xlane.xlu0 %399
      %vm401 = vcmask 19456
      %v402 = vsel %vm401, %v396, 0.0
      %403 = vadd.xlane.f32.xlu0 %v402
      %v404 = vpop.xlane.xlu0 %403
      %v405 = vrsqrt.pop %v400
      %v406 = vmul.f32 %v400, %v405
      %vm407 = vcmp.eq.f32.partialorder %v400, inf
      %v408 = vsel %vm407, %v400, %v406
      %vm409 = vcmp.eq.f32.partialorder %v400, 0.0
      %v410 = vand.u32 %v400, 2147483648
      %v411 = vsel %vm409, %v410, %v408
      %v412 = vrsqrt.pop %v404
      %v413 = vmul.f32 %v404, %v412
      %vm414 = vcmp.eq.f32.partialorder %v404, inf
      %v415 = vsel %vm414, %v404, %v413
      %vm416 = vcmp.eq.f32.partialorder %v404, 0.0
      %v417 = vand.u32 %v404, 2147483648
      %v418 = vsel %vm416, %v417, %v415
      %v419 = vadd.f32 %v411, 1e-12
      %v420 = vadd.f32 %v418, 1e-12
      %v421 = vrcp.pop %v419
      %v422 = vrcp.pop %v420
      %v423 = vmul.f32 %v393, %v421
      %v424 = vmul.f32 %v394, %v422
      %425 = vst.msk [vmem:[%s303] sm:$0xff] %vm397, %v423
      %426 = vst.msk [vmem:[%s303 + $0x8] sm:$0xf] %vm401, %v424
      %v427 = vmul.f32 %v423, %v423
      %v428 = vmul.f32 %v424, %v424
      %v429 = vsel %vm397, %v427, 0.0
      %430 = vadd.xlane.f32.xlu0 %v429
      %v431 = vpop.xlane.xlu0 %430
      %v432 = vsel %vm401, %v428, 0.0
      %433 = vadd.xlane.f32.xlu0 %v432
      %v434 = vpop.xlane.xlu0 %433
      %v436 = vsel %vm397, %v423, 0
      %v439 = vsel %vm397, %v424, 0
      %441 = vmatprep.subr.mxu0 0.0
      %442 = vmatpush1.xpose.msra.mxu0 %v436
      %443 = vmatprep.subr.mxu0 0.0
      %444 = vmatpush1.xpose.msra.mxu0 %v439
      %445 = vmatprep.subr.mxu0 0.0
      %446 = vmatpush1.xpose.msra.mxu0 0.0
      %447 = vmatprep.subr.mxu0 0.0
      %448 = vmatpush1.xpose.msra.mxu0 0.0
      %449 = vmatprep.subr.mxu0 0.0
      %450 = vmatpush1.xpose.msra.mxu0 0.0
      %451 = vmatprep.subr.mxu0 0.0
      %452 = vmatpush1.xpose.msra.mxu0 0.0
      %453 = vmatprep.subr.mxu0 0.0
      %454 = vmatpush1.xpose.msra.mxu0 0.0
      %455 = vmatprep.subr.mxu0 0.0
      %456 = vmatpush1.xpose.msra.mxu0 0.0
      %457 = vmatprep.subr.mxu0 0.0
      %458 = vmatpush1.xpose.msra.mxu0 0.0
      %459 = vmatprep.subr.mxu0 0.0
      %460 = vmatpush1.xpose.msra.mxu0 0.0
      %461 = vmatprep.subr.mxu0 0.0
      %462 = vmatpush1.xpose.msra.mxu0 0.0
      %463 = vmatprep.subr.mxu0 0.0
      %464 = vmatpush1.xpose.msra.mxu0 0.0
      %465 = vmatprep.subr.mxu0 0.0
      %466 = vmatpush1.xpose.msra.mxu0 0.0
      %467 = vmatprep.subr.mxu0 0.0
      %468 = vmatpush1.xpose.msra.mxu0 0.0
      %469 = vmatprep.subr.mxu0 0.0
      %470 = vmatpush1.xpose.msra.mxu0 0.0
      %471 = vmatprep.subr.mxu0 0.0
      %472 = vmatpush1.xpose.msra.mxu0 0.0
      %473 = vmatprep.subr.mxu0 0.0
      %474 = vmatpush1.xpose.msra.mxu0 0.0
      %475 = vmatprep.subr.mxu0 0.0
      %476 = vmatpush1.xpose.msra.mxu0 0.0
      %477 = vmatprep.subr.mxu0 0.0
      %478 = vmatpush1.xpose.msra.mxu0 0.0
      %479 = vmatprep.subr.mxu0 0.0
      %480 = vmatpush1.xpose.msra.mxu0 0.0
      %481 = vmatprep.subr.mxu0 0.0
      %482 = vmatpush1.xpose.msra.mxu0 0.0
      %483 = vmatprep.subr.mxu0 0.0
      %484 = vmatpush1.xpose.msra.mxu0 0.0
      %485 = vmatprep.subr.mxu0 0.0
      %486 = vmatpush1.xpose.msra.mxu0 0.0
      %487 = vmatprep.subr.mxu0 0.0
      %488 = vmatpush1.xpose.msra.mxu0 0.0
      %489 = vmatprep.subr.mxu0 0.0
      %490 = vmatpush1.xpose.msra.mxu0 0.0
      %491 = vmatprep.subr.mxu0 0.0
      %492 = vmatpush1.xpose.msra.mxu0 0.0
      %493 = vmatprep.subr.mxu0 0.0
      %494 = vmatpush1.xpose.msra.mxu0 0.0
      %495 = vmatprep.subr.mxu0 0.0
      %496 = vmatpush1.xpose.msra.mxu0 0.0
      %497 = vmatprep.subr.mxu0 0.0
      %498 = vmatpush1.xpose.msra.mxu0 0.0
      %499 = vmatprep.subr.mxu0 0.0
      %500 = vmatpush1.xpose.msra.mxu0 0.0
      %501 = vmatprep.subr.mxu0 0.0
      %502 = vmatpush1.xpose.msra.mxu0 0.0
      %503 = vmatprep.subr.mxu0 0.0
      %504 = vmatpush1.xpose.msra.mxu0 0.0
      %505 = vmatprep.mubr.f32.mxu0 0.0
      %506 = vmatmul.mubr.f32.gmra.mrb[0].mxu0 %v436
      %v507 = vpop.f32.mrb[0].mxu0
      %v508 = vadd.f32 0.0, %v507
      %v509 = vpop.f32.mrb[0].mxu0
      %510 = vmatprep.mubr.f32.mxu0 0.0
      %511 = vmatmul.mubr.f32.gmra.mrb[0].mxu0 %v439
      %v512 = vpop.f32.mrb[0].mxu0
      %v513 = vadd.f32 0.0, %v512
      %v514 = vpop.f32.mrb[0].mxu0
      %515 = vdwg.mxu0
      %516 = vxpose.xlu0.b32.start [1/16] %v431, 128
      %517 = vxpose.xlu0.b32.cont [2/16] %v434, 128
      %518 = vxpose.xlu0.b32.cont [3/16] 0.0, 128
      %519 = vxpose.xlu0.b32.cont [4/16] 0.0, 128
      %520 = vxpose.xlu0.b32.cont [5/16] 0.0, 128
      %521 = vxpose.xlu0.b32.cont [6/16] 0.0, 128
      %522 = vxpose.xlu0.b32.cont [7/16] 0.0, 128
      %523 = vxpose.xlu0.b32.cont [8/16] 0.0, 128
      %524 = vxpose.xlu0.b32.cont [9/16] 0.0, 128
      %525 = vxpose.xlu0.b32.cont [10/16] 0.0, 128
      %526 = vxpose.xlu0.b32.cont [11/16] 0.0, 128
      %527 = vxpose.xlu0.b32.cont [12/16] 0.0, 128
      %528 = vxpose.xlu0.b32.cont [13/16] 0.0, 128
      %529 = vxpose.xlu0.b32.cont [14/16] 0.0, 128
      %530 = vxpose.xlu0.b32.cont [15/16] 0.0, 128
      %531 = vxpose.xlu0.b32.end [16/16] 0.0, 128
      %v532 = vpop.trf.xlu0
      %v533 = vpop.trf.xlu0
      %v534 = vpop.trf.xlu0
      %v535 = vpop.trf.xlu0
      %v536 = vpop.trf.xlu0
      %v537 = vpop.trf.xlu0
      %v538 = vpop.trf.xlu0
      %v539 = vpop.trf.xlu0
      %v540 = vpop.trf.xlu0
      %v541 = vpop.trf.xlu0
      %v542 = vpop.trf.xlu0
      %v543 = vpop.trf.xlu0
      %v544 = vpop.trf.xlu0
      %v545 = vpop.trf.xlu0
      %v546 = vpop.trf.xlu0
      %v547 = vpop.trf.xlu0
      %v548 = vlaneseq
      %v549 = vshrl.u32 %v548, 7
      %v550 = vsub.s32 0, %v549
      %v551 = vrot.slane %v532, %v550
      %v552 = vadd.f32 %v431, %v551
      %v553 = vadd.f32 %v434, %v551
      %v554 = vmul.f32 %v508, 2.0
      %v555 = vmul.f32 %v513, 2.0
      %v556 = vsub.f32 %v552, %v554
      %v557 = vsub.f32 %v553, %v555
      %v558 = vmax.f32 %v556, 0.0
      %v559 = vmax.f32 %v557, 0.0
      %v560 = vmul.f32 %v558, -12.5
      %v561 = vmul.f32 %v559, -12.5
      %v562 = vmul.f32 %v560, 1.442695
      %v563 = vpow.pop %v562
      %v564 = vmul.f32 %v561, 1.442695
      %v565 = vpow.pop %v564
      %v566 = vlaneseq
      %v567 = vshrl.u32 %v566, 7
      %v568 = vadd.s32 %v567, 8
      %v569 = vlaneseq
      %v570 = vand.u32 %v569, 127
      %vm571 = vcmp.eq.s32.totalorder %v567, %v570
      %vm572 = vcmp.eq.s32.totalorder %v568, %v570
      %v573 = vsel %vm571, 0.0, %v563
      %v574 = vsel %vm572, 0.0, %v565
      %v575 = vmul.f32 %v314, %v573
      %v576 = vmul.f32 %v315, %v574
      %v577 = vmax.f32 %v363, 1e-06
      %v578 = vmax.f32 %v364, 1e-06
      %v579 = vmin.f32 %v577, 1.0
      %v580 = vmin.f32 %v578, 1.0
      %v581 = vlog2.pop %v579
      %v582 = vmul.f32 %v581, 0.6931472
      %v583 = vlog2.pop %v580
      %v584 = vmul.f32 %v583, 0.6931472
      %v585 = vsel %vm323, %v582, -inf
      %586 = vmax.xlane.f32.xlu0 %v585
      %v587 = vpop.xlane.xlu0 %586
      %v588 = vsel %vm327, %v584, -inf
      %589 = vmax.xlane.f32.xlu0 %v588
      %v590 = vpop.xlane.xlu0 %589
      %v591 = vsub.f32 %v582, %v587
      %v592 = vsub.f32 %v584, %v590
      %v593 = vmul.f32 %v591, 1.442695
      %v594 = vpow.pop %v593
      %v595 = vmul.f32 %v592, 1.442695
      %v596 = vpow.pop %v595
      %v597 = vsel %vm323, %v594, 0.0
      %598 = vadd.xlane.f32.xlu0 %v597
      %v599 = vpop.xlane.xlu0 %598
      %v600 = vsel %vm327, %v596, 0.0
      %601 = vadd.xlane.f32.xlu0 %v600
      %v602 = vpop.xlane.xlu0 %601
      %v603 = vrcp.pop %v599
      %v604 = vrcp.pop %v602
      %v605 = vmul.f32 %v594, %v603
      %v606 = vmul.f32 %v596, %v604
      %vm607 = vcmask 97280
      %v609 = vsel %vm607, %v316, 0
      %v612 = vsel %vm607, %v317, 0
      %vm614 = vcmask 1043456
      %v616 = vsel %vm614, %v576, 0
      %618 = vmatprep.subr.mxu0 0.0
      %619 = vmatpush1.msra.mxu0 %v575
      %620 = vmatprep.subr.mxu0 0.0
      %621 = vmatpush1.msra.mxu0 %v616
      %622 = vmatprep.subr.mxu0 0.0
      %623 = vmatpush1.msra.mxu0 0.0
      %624 = vmatprep.subr.mxu0 0.0
      %625 = vmatpush1.msra.mxu0 0.0
      %626 = vmatprep.subr.mxu0 0.0
      %627 = vmatpush1.msra.mxu0 0.0
      %628 = vmatprep.subr.mxu0 0.0
      %629 = vmatpush1.msra.mxu0 0.0
      %630 = vmatprep.subr.mxu0 0.0
      %631 = vmatpush1.msra.mxu0 0.0
      %632 = vmatprep.subr.mxu0 0.0
      %633 = vmatpush1.msra.mxu0 0.0
      %634 = vmatprep.subr.mxu0 0.0
      %635 = vmatpush1.msra.mxu0 0.0
      %636 = vmatprep.subr.mxu0 0.0
      %637 = vmatpush1.msra.mxu0 0.0
      %638 = vmatprep.subr.mxu0 0.0
      %639 = vmatpush1.msra.mxu0 0.0
      %640 = vmatprep.subr.mxu0 0.0
      %641 = vmatpush1.msra.mxu0 0.0
      %642 = vmatprep.subr.mxu0 0.0
      %643 = vmatpush1.msra.mxu0 0.0
      %644 = vmatprep.subr.mxu0 0.0
      %645 = vmatpush1.msra.mxu0 0.0
      %646 = vmatprep.subr.mxu0 0.0
      %647 = vmatpush1.msra.mxu0 0.0
      %648 = vmatprep.subr.mxu0 0.0
      %649 = vmatpush1.msra.mxu0 0.0
      %650 = vmatprep.subr.mxu0 0.0
      %651 = vmatpush1.msra.mxu0 0.0
      %652 = vmatprep.subr.mxu0 0.0
      %653 = vmatpush1.msra.mxu0 0.0
      %654 = vmatprep.subr.mxu0 0.0
      %655 = vmatpush1.msra.mxu0 0.0
      %656 = vmatprep.subr.mxu0 0.0
      %657 = vmatpush1.msra.mxu0 0.0
      %658 = vmatprep.subr.mxu0 0.0
      %659 = vmatpush1.msra.mxu0 0.0
      %660 = vmatprep.subr.mxu0 0.0
      %661 = vmatpush1.msra.mxu0 0.0
      %662 = vmatprep.subr.mxu0 0.0
      %663 = vmatpush1.msra.mxu0 0.0
      %664 = vmatprep.subr.mxu0 0.0
      %665 = vmatpush1.msra.mxu0 0.0
      %666 = vmatprep.subr.mxu0 0.0
      %667 = vmatpush1.msra.mxu0 0.0
      %668 = vmatprep.subr.mxu0 0.0
      %669 = vmatpush1.msra.mxu0 0.0
      %670 = vmatprep.subr.mxu0 0.0
      %671 = vmatpush1.msra.mxu0 0.0
      %672 = vmatprep.subr.mxu0 0.0
      %673 = vmatpush1.msra.mxu0 0.0
      %674 = vmatprep.subr.mxu0 0.0
      %675 = vmatpush1.msra.mxu0 0.0
      %676 = vmatprep.subr.mxu0 0.0
      %677 = vmatpush1.msra.mxu0 0.0
      %678 = vmatprep.subr.mxu0 0.0
      %679 = vmatpush1.msra.mxu0 0.0
      %680 = vmatprep.subr.mxu0 0.0
      %681 = vmatpush1.msra.mxu0 0.0
      %682 = vmatprep.mubr.f32.mxu0 0.0
      %683 = vmatmul.mubr.f32.gmra.mrb[0].mxu0 %v609
      %v684 = vpop.f32.mrb[0].mxu0
      %v685 = vadd.f32 0.0, %v684
      %v686 = vpop.f32.mrb[0].mxu0
      %687 = vmatprep.mubr.f32.mxu0 0.0
      %688 = vmatmul.mubr.f32.gmra.mrb[0].mxu0 %v612
      %v689 = vpop.f32.mrb[0].mxu0
      %v690 = vadd.f32 0.0, %v689
      %v691 = vpop.f32.mrb[0].mxu0
      %692 = vdwg.mxu0
      %v694 = vsel %vm607, %v685, 0
      %v697 = vsel %vm607, %v690, 0
      %v700 = vsel %vm614, %v606, 0
      %702 = vmatprep.subr.mxu0 0.0
      %703 = vmatpush1.msra.mxu0 %v605
      %704 = vmatprep.subr.mxu0 0.0
      %705 = vmatpush1.msra.mxu0 %v700
      %706 = vmatprep.subr.mxu0 0.0
      %707 = vmatpush1.msra.mxu0 0.0
      %708 = vmatprep.subr.mxu0 0.0
      %709 = vmatpush1.msra.mxu0 0.0
      %710 = vmatprep.subr.mxu0 0.0
      %711 = vmatpush1.msra.mxu0 0.0
      %712 = vmatprep.subr.mxu0 0.0
      %713 = vmatpush1.msra.mxu0 0.0
      %714 = vmatprep.subr.mxu0 0.0
      %715 = vmatpush1.msra.mxu0 0.0
      %716 = vmatprep.subr.mxu0 0.0
      %717 = vmatpush1.msra.mxu0 0.0
      %718 = vmatprep.subr.mxu0 0.0
      %719 = vmatpush1.msra.mxu0 0.0
      %720 = vmatprep.subr.mxu0 0.0
      %721 = vmatpush1.msra.mxu0 0.0
      %722 = vmatprep.subr.mxu0 0.0
      %723 = vmatpush1.msra.mxu0 0.0
      %724 = vmatprep.subr.mxu0 0.0
      %725 = vmatpush1.msra.mxu0 0.0
      %726 = vmatprep.subr.mxu0 0.0
      %727 = vmatpush1.msra.mxu0 0.0
      %728 = vmatprep.subr.mxu0 0.0
      %729 = vmatpush1.msra.mxu0 0.0
      %730 = vmatprep.subr.mxu0 0.0
      %731 = vmatpush1.msra.mxu0 0.0
      %732 = vmatprep.subr.mxu0 0.0
      %733 = vmatpush1.msra.mxu0 0.0
      %734 = vmatprep.subr.mxu0 0.0
      %735 = vmatpush1.msra.mxu0 0.0
      %736 = vmatprep.subr.mxu0 0.0
      %737 = vmatpush1.msra.mxu0 0.0
      %738 = vmatprep.subr.mxu0 0.0
      %739 = vmatpush1.msra.mxu0 0.0
      %740 = vmatprep.subr.mxu0 0.0
      %741 = vmatpush1.msra.mxu0 0.0
      %742 = vmatprep.subr.mxu0 0.0
      %743 = vmatpush1.msra.mxu0 0.0
      %744 = vmatprep.subr.mxu0 0.0
      %745 = vmatpush1.msra.mxu0 0.0
      %746 = vmatprep.subr.mxu0 0.0
      %747 = vmatpush1.msra.mxu0 0.0
      %748 = vmatprep.subr.mxu0 0.0
      %749 = vmatpush1.msra.mxu0 0.0
      %750 = vmatprep.subr.mxu0 0.0
      %751 = vmatpush1.msra.mxu0 0.0
      %752 = vmatprep.subr.mxu0 0.0
      %753 = vmatpush1.msra.mxu0 0.0
      %754 = vmatprep.subr.mxu0 0.0
      %755 = vmatpush1.msra.mxu0 0.0
      %756 = vmatprep.subr.mxu0 0.0
      %757 = vmatpush1.msra.mxu0 0.0
      %758 = vmatprep.subr.mxu0 0.0
      %759 = vmatpush1.msra.mxu0 0.0
      %760 = vmatprep.subr.mxu0 0.0
      %761 = vmatpush1.msra.mxu0 0.0
      %762 = vmatprep.subr.mxu0 0.0
      %763 = vmatpush1.msra.mxu0 0.0
      %764 = vmatprep.subr.mxu0 0.0
      %765 = vmatpush1.msra.mxu0 0.0
      %766 = vmatprep.mubr.f32.mxu0 0.0
      %767 = vmatmul.mubr.f32.gmra.mrb[0].mxu0 %v694
      %v768 = vpop.f32.mrb[0].mxu0
      %v769 = vadd.f32 0.0, %v768
      %v770 = vpop.f32.mrb[0].mxu0
      %771 = vmatprep.mubr.f32.mxu0 0.0
      %772 = vmatmul.mubr.f32.gmra.mrb[0].mxu0 %v697
      %v773 = vpop.f32.mrb[0].mxu0
      %v774 = vadd.f32 0.0, %v773
      %v775 = vpop.f32.mrb[0].mxu0
      %776 = vdwg.mxu0
      %v778 = vsel %vm323, %v769, 0
      %v781 = vsel %vm323, %v774, 0
      %783 = vmatprep.subr.mxu0 0.0
      %784 = vmatpush1.msra.mxu0 %v318
      %785 = vmatprep.subr.mxu0 0.0
      %786 = vmatpush1.msra.mxu0 0.0
      %787 = vmatprep.subr.mxu0 0.0
      %788 = vmatpush1.msra.mxu0 0.0
      %789 = vmatprep.subr.mxu0 0.0
      %790 = vmatpush1.msra.mxu0 0.0
      %791 = vmatprep.subr.mxu0 0.0
      %792 = vmatpush1.msra.mxu0 0.0
      %793 = vmatprep.subr.mxu0 0.0
      %794 = vmatpush1.msra.mxu0 0.0
      %795 = vmatprep.subr.mxu0 0.0
      %796 = vmatpush1.msra.mxu0 0.0
      %797 = vmatprep.subr.mxu0 0.0
      %798 = vmatpush1.msra.mxu0 0.0
      %799 = vmatprep.subr.mxu0 0.0
      %800 = vmatpush1.msra.mxu0 0.0
      %801 = vmatprep.subr.mxu0 0.0
      %802 = vmatpush1.msra.mxu0 0.0
      %803 = vmatprep.subr.mxu0 0.0
      %804 = vmatpush1.msra.mxu0 0.0
      %805 = vmatprep.subr.mxu0 0.0
      %806 = vmatpush1.msra.mxu0 0.0
      %807 = vmatprep.subr.mxu0 0.0
      %808 = vmatpush1.msra.mxu0 0.0
      %809 = vmatprep.subr.mxu0 0.0
      %810 = vmatpush1.msra.mxu0 0.0
      %811 = vmatprep.subr.mxu0 0.0
      %812 = vmatpush1.msra.mxu0 0.0
      %813 = vmatprep.subr.mxu0 0.0
      %814 = vmatpush1.msra.mxu0 0.0
      %815 = vmatprep.subr.mxu0 0.0
      %816 = vmatpush1.msra.mxu0 0.0
      %817 = vmatprep.subr.mxu0 0.0
      %818 = vmatpush1.msra.mxu0 0.0
      %819 = vmatprep.subr.mxu0 0.0
      %820 = vmatpush1.msra.mxu0 0.0
      %821 = vmatprep.subr.mxu0 0.0
      %822 = vmatpush1.msra.mxu0 0.0
      %823 = vmatprep.subr.mxu0 0.0
      %824 = vmatpush1.msra.mxu0 0.0
      %825 = vmatprep.subr.mxu0 0.0
      %826 = vmatpush1.msra.mxu0 0.0
      %827 = vmatprep.subr.mxu0 0.0
      %828 = vmatpush1.msra.mxu0 0.0
      %829 = vmatprep.subr.mxu0 0.0
      %830 = vmatpush1.msra.mxu0 0.0
      %831 = vmatprep.subr.mxu0 0.0
      %832 = vmatpush1.msra.mxu0 0.0
      %833 = vmatprep.subr.mxu0 0.0
      %834 = vmatpush1.msra.mxu0 0.0
      %835 = vmatprep.subr.mxu0 0.0
      %836 = vmatpush1.msra.mxu0 0.0
      %837 = vmatprep.subr.mxu0 0.0
      %838 = vmatpush1.msra.mxu0 0.0
      %839 = vmatprep.subr.mxu0 0.0
      %840 = vmatpush1.msra.mxu0 0.0
      %841 = vmatprep.subr.mxu0 0.0
      %842 = vmatpush1.msra.mxu0 0.0
      %843 = vmatprep.subr.mxu0 0.0
      %844 = vmatpush1.msra.mxu0 0.0
      %845 = vmatprep.subr.mxu0 0.0
      %846 = vmatpush1.msra.mxu0 0.0
      %847 = vmatprep.mubr.f32.mxu0 0.0
      %848 = vmatmul.mubr.f32.gmra.mrb[0].mxu0 %v778
      %v849 = vpop.f32.mrb[0].mxu0
      %v850 = vadd.f32 0.0, %v849
      %v851 = vpop.f32.mrb[0].mxu0
      %852 = vmatprep.mubr.f32.mxu0 0.0
      %853 = vmatmul.mubr.f32.gmra.mrb[0].mxu0 %v781
      %v854 = vpop.f32.mrb[0].mxu0
      %v855 = vadd.f32 0.0, %v854
      %v856 = vpop.f32.mrb[0].mxu0
      %857 = vdwg.mxu0
      %v858 = vadd.f32 %v582, %v850
      %v859 = vadd.f32 %v584, %v855
      %v860 = vsel %vm323, %v858, -inf
      %861 = vmax.xlane.f32.xlu0 %v860
      %v862 = vpop.xlane.xlu0 %861
      %v863 = vsel %vm327, %v859, -inf
      %864 = vmax.xlane.f32.xlu0 %v863
      %v865 = vpop.xlane.xlu0 %864
      %v866 = vsub.f32 %v858, %v862
      %v867 = vsub.f32 %v859, %v865
      %v868 = vmul.f32 %v866, 1.442695
      %v869 = vpow.pop %v868
      %v870 = vmul.f32 %v867, 1.442695
      %v871 = vpow.pop %v870
      %v872 = vsel %vm323, %v869, 0.0
      %873 = vadd.xlane.f32.xlu0 %v872
      %v874 = vpop.xlane.xlu0 %873
      %v875 = vsel %vm327, %v871, 0.0
      %876 = vadd.xlane.f32.xlu0 %v875
      %v877 = vpop.xlane.xlu0 %876
      %v878 = vrcp.pop %v874
      %v879 = vrcp.pop %v877
      %v880 = vmul.f32 %v869, %v878
      %v881 = vmul.f32 %v871, %v879
      %v883 = vsel %vm614, %v881, 0
      %885 = vmatprep.subr.mxu0 0.0
      %886 = vmatpush1.msra.mxu0 %v880
      %887 = vmatprep.subr.mxu0 0.0
      %888 = vmatpush1.msra.mxu0 %v883
      %889 = vmatprep.subr.mxu0 0.0
      %890 = vmatpush1.msra.mxu0 0.0
      %891 = vmatprep.subr.mxu0 0.0
      %892 = vmatpush1.msra.mxu0 0.0
      %893 = vmatprep.subr.mxu0 0.0
      %894 = vmatpush1.msra.mxu0 0.0
      %895 = vmatprep.subr.mxu0 0.0
      %896 = vmatpush1.msra.mxu0 0.0
      %897 = vmatprep.subr.mxu0 0.0
      %898 = vmatpush1.msra.mxu0 0.0
      %899 = vmatprep.subr.mxu0 0.0
      %900 = vmatpush1.msra.mxu0 0.0
      %901 = vmatprep.subr.mxu0 0.0
      %902 = vmatpush1.msra.mxu0 0.0
      %903 = vmatprep.subr.mxu0 0.0
      %904 = vmatpush1.msra.mxu0 0.0
      %905 = vmatprep.subr.mxu0 0.0
      %906 = vmatpush1.msra.mxu0 0.0
      %907 = vmatprep.subr.mxu0 0.0
      %908 = vmatpush1.msra.mxu0 0.0
      %909 = vmatprep.subr.mxu0 0.0
      %910 = vmatpush1.msra.mxu0 0.0
      %911 = vmatprep.subr.mxu0 0.0
      %912 = vmatpush1.msra.mxu0 0.0
      %913 = vmatprep.subr.mxu0 0.0
      %914 = vmatpush1.msra.mxu0 0.0
      %915 = vmatprep.subr.mxu0 0.0
      %916 = vmatpush1.msra.mxu0 0.0
      %917 = vmatprep.subr.mxu0 0.0
      %918 = vmatpush1.msra.mxu0 0.0
      %919 = vmatprep.subr.mxu0 0.0
      %920 = vmatpush1.msra.mxu0 0.0
      %921 = vmatprep.subr.mxu0 0.0
      %922 = vmatpush1.msra.mxu0 0.0
      %923 = vmatprep.subr.mxu0 0.0
      %924 = vmatpush1.msra.mxu0 0.0
      %925 = vmatprep.subr.mxu0 0.0
      %926 = vmatpush1.msra.mxu0 0.0
      %927 = vmatprep.subr.mxu0 0.0
      %928 = vmatpush1.msra.mxu0 0.0
      %929 = vmatprep.subr.mxu0 0.0
      %930 = vmatpush1.msra.mxu0 0.0
      %931 = vmatprep.subr.mxu0 0.0
      %932 = vmatpush1.msra.mxu0 0.0
      %933 = vmatprep.subr.mxu0 0.0
      %934 = vmatpush1.msra.mxu0 0.0
      %935 = vmatprep.subr.mxu0 0.0
      %936 = vmatpush1.msra.mxu0 0.0
      %937 = vmatprep.subr.mxu0 0.0
      %938 = vmatpush1.msra.mxu0 0.0
      %939 = vmatprep.subr.mxu0 0.0
      %940 = vmatpush1.msra.mxu0 0.0
      %941 = vmatprep.subr.mxu0 0.0
      %942 = vmatpush1.msra.mxu0 0.0
      %943 = vmatprep.subr.mxu0 0.0
      %944 = vmatpush1.msra.mxu0 0.0
      %945 = vmatprep.subr.mxu0 0.0
      %946 = vmatpush1.msra.mxu0 0.0
      %947 = vmatprep.subr.mxu0 0.0
      %948 = vmatpush1.msra.mxu0 0.0
      %949 = vmatprep.mubr.f32.mxu0 0.0
      %950 = vmatmul.mubr.f32.gmra.mrb[0].mxu0 %v694
      %v951 = vpop.f32.mrb[0].mxu0
      %v952 = vadd.f32 0.0, %v951
      %v953 = vpop.f32.mrb[0].mxu0
      %954 = vmatprep.mubr.f32.mxu0 0.0
      %955 = vmatmul.mubr.f32.gmra.mrb[0].mxu0 %v697
      %v956 = vpop.f32.mrb[0].mxu0
      %v957 = vadd.f32 0.0, %v956
      %v958 = vpop.f32.mrb[0].mxu0
      %959 = vdwg.mxu0
      %v961 = vsel %vm323, %v952, 0
      %v964 = vsel %vm323, %v957, 0
      %966 = vmatprep.subr.mxu0 0.0
      %967 = vmatpush1.msra.mxu0 %v318
      %968 = vmatprep.subr.mxu0 0.0
      %969 = vmatpush1.msra.mxu0 0.0
      %970 = vmatprep.subr.mxu0 0.0
      %971 = vmatpush1.msra.mxu0 0.0
      %972 = vmatprep.subr.mxu0 0.0
      %973 = vmatpush1.msra.mxu0 0.0
      %974 = vmatprep.subr.mxu0 0.0
      %975 = vmatpush1.msra.mxu0 0.0
      %976 = vmatprep.subr.mxu0 0.0
      %977 = vmatpush1.msra.mxu0 0.0
      %978 = vmatprep.subr.mxu0 0.0
      %979 = vmatpush1.msra.mxu0 0.0
      %980 = vmatprep.subr.mxu0 0.0
      %981 = vmatpush1.msra.mxu0 0.0
      %982 = vmatprep.subr.mxu0 0.0
      %983 = vmatpush1.msra.mxu0 0.0
      %984 = vmatprep.subr.mxu0 0.0
      %985 = vmatpush1.msra.mxu0 0.0
      %986 = vmatprep.subr.mxu0 0.0
      %987 = vmatpush1.msra.mxu0 0.0
      %988 = vmatprep.subr.mxu0 0.0
      %989 = vmatpush1.msra.mxu0 0.0
      %990 = vmatprep.subr.mxu0 0.0
      %991 = vmatpush1.msra.mxu0 0.0
      %992 = vmatprep.subr.mxu0 0.0
      %993 = vmatpush1.msra.mxu0 0.0
      %994 = vmatprep.subr.mxu0 0.0
      %995 = vmatpush1.msra.mxu0 0.0
      %996 = vmatprep.subr.mxu0 0.0
      %997 = vmatpush1.msra.mxu0 0.0
      %998 = vmatprep.subr.mxu0 0.0
      %999 = vmatpush1.msra.mxu0 0.0
      %1000 = vmatprep.subr.mxu0 0.0
      %1001 = vmatpush1.msra.mxu0 0.0
      %1002 = vmatprep.subr.mxu0 0.0
      %1003 = vmatpush1.msra.mxu0 0.0
      %1004 = vmatprep.subr.mxu0 0.0
      %1005 = vmatpush1.msra.mxu0 0.0
      %1006 = vmatprep.subr.mxu0 0.0
      %1007 = vmatpush1.msra.mxu0 0.0
      %1008 = vmatprep.subr.mxu0 0.0
      %1009 = vmatpush1.msra.mxu0 0.0
      %1010 = vmatprep.subr.mxu0 0.0
      %1011 = vmatpush1.msra.mxu0 0.0
      %1012 = vmatprep.subr.mxu0 0.0
      %1013 = vmatpush1.msra.mxu0 0.0
      %1014 = vmatprep.subr.mxu0 0.0
      %1015 = vmatpush1.msra.mxu0 0.0
      %1016 = vmatprep.subr.mxu0 0.0
      %1017 = vmatpush1.msra.mxu0 0.0
      %1018 = vmatprep.subr.mxu0 0.0
      %1019 = vmatpush1.msra.mxu0 0.0
      %1020 = vmatprep.subr.mxu0 0.0
      %1021 = vmatpush1.msra.mxu0 0.0
      %1022 = vmatprep.subr.mxu0 0.0
      %1023 = vmatpush1.msra.mxu0 0.0
      %1024 = vmatprep.subr.mxu0 0.0
      %1025 = vmatpush1.msra.mxu0 0.0
      %1026 = vmatprep.subr.mxu0 0.0
      %1027 = vmatpush1.msra.mxu0 0.0
      %1028 = vmatprep.subr.mxu0 0.0
      %1029 = vmatpush1.msra.mxu0 0.0
      %1030 = vmatprep.mubr.f32.mxu0 0.0
      %1031 = vmatmul.mubr.f32.gmra.mrb[0].mxu0 %v961
      %v1032 = vpop.f32.mrb[0].mxu0
      %v1033 = vadd.f32 0.0, %v1032
      %v1034 = vpop.f32.mrb[0].mxu0
      %1035 = vmatprep.mubr.f32.mxu0 0.0
      %1036 = vmatmul.mubr.f32.gmra.mrb[0].mxu0 %v964
      %v1037 = vpop.f32.mrb[0].mxu0
      %v1038 = vadd.f32 0.0, %v1037
      %v1039 = vpop.f32.mrb[0].mxu0
      %1040 = vdwg.mxu0
      %v1041 = vadd.f32 %v582, %v1033
      %v1042 = vadd.f32 %v584, %v1038
      %v1043 = vsel %vm323, %v1041, -inf
      %1044 = vmax.xlane.f32.xlu0 %v1043
      %v1045 = vpop.xlane.xlu0 %1044
      %v1046 = vsel %vm327, %v1042, -inf
      %1047 = vmax.xlane.f32.xlu0 %v1046
      %v1048 = vpop.xlane.xlu0 %1047
      %v1049 = vsub.f32 %v1041, %v1045
      %v1050 = vsub.f32 %v1042, %v1048
      %v1051 = vmul.f32 %v1049, 1.442695
      %v1052 = vpow.pop %v1051
      %v1053 = vmul.f32 %v1050, 1.442695
      %v1054 = vpow.pop %v1053
      %v1055 = vsel %vm323, %v1052, 0.0
      %1056 = vadd.xlane.f32.xlu0 %v1055
      %v1057 = vpop.xlane.xlu0 %1056
      %v1058 = vsel %vm327, %v1054, 0.0
      %1059 = vadd.xlane.f32.xlu0 %v1058
      %v1060 = vpop.xlane.xlu0 %1059
      %v1061 = vrcp.pop %v1057
      %v1062 = vrcp.pop %v1060
      %v1063 = vmul.f32 %v1052, %v1061
      %v1064 = vmul.f32 %v1054, %v1062
      %v1066 = vsel %vm614, %v1064, 0
      %1068 = vmatprep.subr.mxu0 0.0
      %1069 = vmatpush1.msra.mxu0 %v1063
      %1070 = vmatprep.subr.mxu0 0.0
      %1071 = vmatpush1.msra.mxu0 %v1066
      %1072 = vmatprep.subr.mxu0 0.0
      %1073 = vmatpush1.msra.mxu0 0.0
      %1074 = vmatprep.subr.mxu0 0.0
      %1075 = vmatpush1.msra.mxu0 0.0
      %1076 = vmatprep.subr.mxu0 0.0
      %1077 = vmatpush1.msra.mxu0 0.0
      %1078 = vmatprep.subr.mxu0 0.0
      %1079 = vmatpush1.msra.mxu0 0.0
      %1080 = vmatprep.subr.mxu0 0.0
      %1081 = vmatpush1.msra.mxu0 0.0
      %1082 = vmatprep.subr.mxu0 0.0
      %1083 = vmatpush1.msra.mxu0 0.0
      %1084 = vmatprep.subr.mxu0 0.0
      %1085 = vmatpush1.msra.mxu0 0.0
      %1086 = vmatprep.subr.mxu0 0.0
      %1087 = vmatpush1.msra.mxu0 0.0
      %1088 = vmatprep.subr.mxu0 0.0
      %1089 = vmatpush1.msra.mxu0 0.0
      %1090 = vmatprep.subr.mxu0 0.0
      %1091 = vmatpush1.msra.mxu0 0.0
      %1092 = vmatprep.subr.mxu0 0.0
      %1093 = vmatpush1.msra.mxu0 0.0
      %1094 = vmatprep.subr.mxu0 0.0
      %1095 = vmatpush1.msra.mxu0 0.0
      %1096 = vmatprep.subr.mxu0 0.0
      %1097 = vmatpush1.msra.mxu0 0.0
      %1098 = vmatprep.subr.mxu0 0.0
      %1099 = vmatpush1.msra.mxu0 0.0
      %1100 = vmatprep.subr.mxu0 0.0
      %1101 = vmatpush1.msra.mxu0 0.0
      %1102 = vmatprep.subr.mxu0 0.0
      %1103 = vmatpush1.msra.mxu0 0.0
      %1104 = vmatprep.subr.mxu0 0.0
      %1105 = vmatpush1.msra.mxu0 0.0
      %1106 = vmatprep.subr.mxu0 0.0
      %1107 = vmatpush1.msra.mxu0 0.0
      %1108 = vmatprep.subr.mxu0 0.0
      %1109 = vmatpush1.msra.mxu0 0.0
      %1110 = vmatprep.subr.mxu0 0.0
      %1111 = vmatpush1.msra.mxu0 0.0
      %1112 = vmatprep.subr.mxu0 0.0
      %1113 = vmatpush1.msra.mxu0 0.0
      %1114 = vmatprep.subr.mxu0 0.0
      %1115 = vmatpush1.msra.mxu0 0.0
      %1116 = vmatprep.subr.mxu0 0.0
      %1117 = vmatpush1.msra.mxu0 0.0
      %1118 = vmatprep.subr.mxu0 0.0
      %1119 = vmatpush1.msra.mxu0 0.0
      %1120 = vmatprep.subr.mxu0 0.0
      %1121 = vmatpush1.msra.mxu0 0.0
      %1122 = vmatprep.subr.mxu0 0.0
      %1123 = vmatpush1.msra.mxu0 0.0
      %1124 = vmatprep.subr.mxu0 0.0
      %1125 = vmatpush1.msra.mxu0 0.0
      %1126 = vmatprep.subr.mxu0 0.0
      %1127 = vmatpush1.msra.mxu0 0.0
      %1128 = vmatprep.subr.mxu0 0.0
      %1129 = vmatpush1.msra.mxu0 0.0
      %1130 = vmatprep.subr.mxu0 0.0
      %1131 = vmatpush1.msra.mxu0 0.0
      %1132 = vmatprep.mubr.f32.mxu0 0.0
      %1133 = vmatmul.mubr.f32.gmra.mrb[0].mxu0 %v694
      %v1134 = vpop.f32.mrb[0].mxu0
      %v1135 = vadd.f32 0.0, %v1134
      %v1136 = vpop.f32.mrb[0].mxu0
      %1137 = vmatprep.mubr.f32.mxu0 0.0
      %1138 = vmatmul.mubr.f32.gmra.mrb[0].mxu0 %v697
      %v1139 = vpop.f32.mrb[0].mxu0
      %v1140 = vadd.f32 0.0, %v1139
      %v1141 = vpop.f32.mrb[0].mxu0
      %1142 = vdwg.mxu0
      %v1144 = vsel %vm323, %v1135, 0
      %v1147 = vsel %vm323, %v1140, 0
      %1149 = vmatprep.subr.mxu0 0.0
      %1150 = vmatpush1.msra.mxu0 %v318
      %1151 = vmatprep.subr.mxu0 0.0
      %1152 = vmatpush1.msra.mxu0 0.0
      %1153 = vmatprep.subr.mxu0 0.0
      %1154 = vmatpush1.msra.mxu0 0.0
      %1155 = vmatprep.subr.mxu0 0.0
      %1156 = vmatpush1.msra.mxu0 0.0
      %1157 = vmatprep.subr.mxu0 0.0
      %1158 = vmatpush1.msra.mxu0 0.0
      %1159 = vmatprep.subr.mxu0 0.0
      %1160 = vmatpush1.msra.mxu0 0.0
      %1161 = vmatprep.subr.mxu0 0.0
      %1162 = vmatpush1.msra.mxu0 0.0
      %1163 = vmatprep.subr.mxu0 0.0
      %1164 = vmatpush1.msra.mxu0 0.0
      %1165 = vmatprep.subr.mxu0 0.0
      %1166 = vmatpush1.msra.mxu0 0.0
      %1167 = vmatprep.subr.mxu0 0.0
      %1168 = vmatpush1.msra.mxu0 0.0
      %1169 = vmatprep.subr.mxu0 0.0
      %1170 = vmatpush1.msra.mxu0 0.0
      %1171 = vmatprep.subr.mxu0 0.0
      %1172 = vmatpush1.msra.mxu0 0.0
      %1173 = vmatprep.subr.mxu0 0.0
      %1174 = vmatpush1.msra.mxu0 0.0
      %1175 = vmatprep.subr.mxu0 0.0
      %1176 = vmatpush1.msra.mxu0 0.0
      %1177 = vmatprep.subr.mxu0 0.0
      %1178 = vmatpush1.msra.mxu0 0.0
      %1179 = vmatprep.subr.mxu0 0.0
      %1180 = vmatpush1.msra.mxu0 0.0
      %1181 = vmatprep.subr.mxu0 0.0
      %1182 = vmatpush1.msra.mxu0 0.0
      %1183 = vmatprep.subr.mxu0 0.0
      %1184 = vmatpush1.msra.mxu0 0.0
      %1185 = vmatprep.subr.mxu0 0.0
      %1186 = vmatpush1.msra.mxu0 0.0
      %1187 = vmatprep.subr.mxu0 0.0
      %1188 = vmatpush1.msra.mxu0 0.0
      %1189 = vmatprep.subr.mxu0 0.0
      %1190 = vmatpush1.msra.mxu0 0.0
      %1191 = vmatprep.subr.mxu0 0.0
      %1192 = vmatpush1.msra.mxu0 0.0
      %1193 = vmatprep.subr.mxu0 0.0
      %1194 = vmatpush1.msra.mxu0 0.0
      %1195 = vmatprep.subr.mxu0 0.0
      %1196 = vmatpush1.msra.mxu0 0.0
      %1197 = vmatprep.subr.mxu0 0.0
      %1198 = vmatpush1.msra.mxu0 0.0
      %1199 = vmatprep.subr.mxu0 0.0
      %1200 = vmatpush1.msra.mxu0 0.0
      %1201 = vmatprep.subr.mxu0 0.0
      %1202 = vmatpush1.msra.mxu0 0.0
      %1203 = vmatprep.subr.mxu0 0.0
      %1204 = vmatpush1.msra.mxu0 0.0
      %1205 = vmatprep.subr.mxu0 0.0
      %1206 = vmatpush1.msra.mxu0 0.0
      %1207 = vmatprep.subr.mxu0 0.0
      %1208 = vmatpush1.msra.mxu0 0.0
      %1209 = vmatprep.subr.mxu0 0.0
      %1210 = vmatpush1.msra.mxu0 0.0
      %1211 = vmatprep.subr.mxu0 0.0
      %1212 = vmatpush1.msra.mxu0 0.0
      %1213 = vmatprep.mubr.f32.mxu0 0.0
      %1214 = vmatmul.mubr.f32.gmra.mrb[0].mxu0 %v1144
      %v1215 = vpop.f32.mrb[0].mxu0
      %v1216 = vadd.f32 0.0, %v1215
      %v1217 = vpop.f32.mrb[0].mxu0
      %1218 = vmatprep.mubr.f32.mxu0 0.0
      %1219 = vmatmul.mubr.f32.gmra.mrb[0].mxu0 %v1147
      %v1220 = vpop.f32.mrb[0].mxu0
      %v1221 = vadd.f32 0.0, %v1220
      %v1222 = vpop.f32.mrb[0].mxu0
      %1223 = vdwg.mxu0
      %v1224 = vadd.f32 %v582, %v1216
      %v1225 = vadd.f32 %v584, %v1221
      %v1226 = vsel %vm323, %v1224, -inf
      %1227 = vmax.xlane.f32.xlu0 %v1226
      %v1228 = vpop.xlane.xlu0 %1227
      %v1229 = vsel %vm327, %v1225, -inf
      %1230 = vmax.xlane.f32.xlu0 %v1229
      %v1231 = vpop.xlane.xlu0 %1230
      %v1232 = vsub.f32 %v1224, %v1228
      %v1233 = vsub.f32 %v1225, %v1231
      %v1234 = vmul.f32 %v1232, 1.442695
      %v1235 = vpow.pop %v1234
      %v1236 = vmul.f32 %v1233, 1.442695
      %v1237 = vpow.pop %v1236
      %v1238 = vsel %vm323, %v1235, 0.0
      %1239 = vadd.xlane.f32.xlu0 %v1238
      %v1240 = vpop.xlane.xlu0 %1239
      %v1241 = vsel %vm327, %v1237, 0.0
      %1242 = vadd.xlane.f32.xlu0 %v1241
      %v1243 = vpop.xlane.xlu0 %1242
      %v1244 = vrcp.pop %v1240
      %v1245 = vrcp.pop %v1243
      %v1246 = vmul.f32 %v1235, %v1244
      %v1247 = vmul.f32 %v1237, %v1245
      %v1249 = vsel %vm614, %v1247, 0
      %1251 = vmatprep.subr.mxu0 0.0
      %1252 = vmatpush1.msra.mxu0 %v1246
      %1253 = vmatprep.subr.mxu0 0.0
      %1254 = vmatpush1.msra.mxu0 %v1249
      %1255 = vmatprep.subr.mxu0 0.0
      %1256 = vmatpush1.msra.mxu0 0.0
      %1257 = vmatprep.subr.mxu0 0.0
      %1258 = vmatpush1.msra.mxu0 0.0
      %1259 = vmatprep.subr.mxu0 0.0
      %1260 = vmatpush1.msra.mxu0 0.0
      %1261 = vmatprep.subr.mxu0 0.0
      %1262 = vmatpush1.msra.mxu0 0.0
      %1263 = vmatprep.subr.mxu0 0.0
      %1264 = vmatpush1.msra.mxu0 0.0
      %1265 = vmatprep.subr.mxu0 0.0
      %1266 = vmatpush1.msra.mxu0 0.0
      %1267 = vmatprep.subr.mxu0 0.0
      %1268 = vmatpush1.msra.mxu0 0.0
      %1269 = vmatprep.subr.mxu0 0.0
      %1270 = vmatpush1.msra.mxu0 0.0
      %1271 = vmatprep.subr.mxu0 0.0
      %1272 = vmatpush1.msra.mxu0 0.0
      %1273 = vmatprep.subr.mxu0 0.0
      %1274 = vmatpush1.msra.mxu0 0.0
      %1275 = vmatprep.subr.mxu0 0.0
      %1276 = vmatpush1.msra.mxu0 0.0
      %1277 = vmatprep.subr.mxu0 0.0
      %1278 = vmatpush1.msra.mxu0 0.0
      %1279 = vmatprep.subr.mxu0 0.0
      %1280 = vmatpush1.msra.mxu0 0.0
      %1281 = vmatprep.subr.mxu0 0.0
      %1282 = vmatpush1.msra.mxu0 0.0
      %1283 = vmatprep.subr.mxu0 0.0
      %1284 = vmatpush1.msra.mxu0 0.0
      %1285 = vmatprep.subr.mxu0 0.0
      %1286 = vmatpush1.msra.mxu0 0.0
      %1287 = vmatprep.subr.mxu0 0.0
      %1288 = vmatpush1.msra.mxu0 0.0
      %1289 = vmatprep.subr.mxu0 0.0
      %1290 = vmatpush1.msra.mxu0 0.0
      %1291 = vmatprep.subr.mxu0 0.0
      %1292 = vmatpush1.msra.mxu0 0.0
      %1293 = vmatprep.subr.mxu0 0.0
      %1294 = vmatpush1.msra.mxu0 0.0
      %1295 = vmatprep.subr.mxu0 0.0
      %1296 = vmatpush1.msra.mxu0 0.0
      %1297 = vmatprep.subr.mxu0 0.0
      %1298 = vmatpush1.msra.mxu0 0.0
      %1299 = vmatprep.subr.mxu0 0.0
      %1300 = vmatpush1.msra.mxu0 0.0
      %1301 = vmatprep.subr.mxu0 0.0
      %1302 = vmatpush1.msra.mxu0 0.0
      %1303 = vmatprep.subr.mxu0 0.0
      %1304 = vmatpush1.msra.mxu0 0.0
      %1305 = vmatprep.subr.mxu0 0.0
      %1306 = vmatpush1.msra.mxu0 0.0
      %1307 = vmatprep.subr.mxu0 0.0
      %1308 = vmatpush1.msra.mxu0 0.0
      %1309 = vmatprep.subr.mxu0 0.0
      %1310 = vmatpush1.msra.mxu0 0.0
      %1311 = vmatprep.subr.mxu0 0.0
      %1312 = vmatpush1.msra.mxu0 0.0
      %1313 = vmatprep.subr.mxu0 0.0
      %1314 = vmatpush1.msra.mxu0 0.0
      %1315 = vmatprep.mubr.f32.mxu0 0.0
      %1316 = vmatmul.mubr.f32.gmra.mrb[0].mxu0 %v694
      %v1317 = vpop.f32.mrb[0].mxu0
      %v1318 = vadd.f32 0.0, %v1317
      %v1319 = vpop.f32.mrb[0].mxu0
      %1320 = vmatprep.mubr.f32.mxu0 0.0
      %1321 = vmatmul.mubr.f32.gmra.mrb[0].mxu0 %v697
      %v1322 = vpop.f32.mrb[0].mxu0
      %v1323 = vadd.f32 0.0, %v1322
      %v1324 = vpop.f32.mrb[0].mxu0
      %1325 = vdwg.mxu0
      %v1327 = vsel %vm323, %v1318, 0
      %v1330 = vsel %vm323, %v1323, 0
      %1332 = vmatprep.subr.mxu0 0.0
      %1333 = vmatpush1.msra.mxu0 %v318
      %1334 = vmatprep.subr.mxu0 0.0
      %1335 = vmatpush1.msra.mxu0 0.0
      %1336 = vmatprep.subr.mxu0 0.0
      %1337 = vmatpush1.msra.mxu0 0.0
      %1338 = vmatprep.subr.mxu0 0.0
      %1339 = vmatpush1.msra.mxu0 0.0
      %1340 = vmatprep.subr.mxu0 0.0
      %1341 = vmatpush1.msra.mxu0 0.0
      %1342 = vmatprep.subr.mxu0 0.0
      %1343 = vmatpush1.msra.mxu0 0.0
      %1344 = vmatprep.subr.mxu0 0.0
      %1345 = vmatpush1.msra.mxu0 0.0
      %1346 = vmatprep.subr.mxu0 0.0
      %1347 = vmatpush1.msra.mxu0 0.0
      %1348 = vmatprep.subr.mxu0 0.0
      %1349 = vmatpush1.msra.mxu0 0.0
      %1350 = vmatprep.subr.mxu0 0.0
      %1351 = vmatpush1.msra.mxu0 0.0
      %1352 = vmatprep.subr.mxu0 0.0
      %1353 = vmatpush1.msra.mxu0 0.0
      %1354 = vmatprep.subr.mxu0 0.0
      %1355 = vmatpush1.msra.mxu0 0.0
      %1356 = vmatprep.subr.mxu0 0.0
      %1357 = vmatpush1.msra.mxu0 0.0
      %1358 = vmatprep.subr.mxu0 0.0
      %1359 = vmatpush1.msra.mxu0 0.0
      %1360 = vmatprep.subr.mxu0 0.0
      %1361 = vmatpush1.msra.mxu0 0.0
      %1362 = vmatprep.subr.mxu0 0.0
      %1363 = vmatpush1.msra.mxu0 0.0
      %1364 = vmatprep.subr.mxu0 0.0
      %1365 = vmatpush1.msra.mxu0 0.0
      %1366 = vmatprep.subr.mxu0 0.0
      %1367 = vmatpush1.msra.mxu0 0.0
      %1368 = vmatprep.subr.mxu0 0.0
      %1369 = vmatpush1.msra.mxu0 0.0
      %1370 = vmatprep.subr.mxu0 0.0
      %1371 = vmatpush1.msra.mxu0 0.0
      %1372 = vmatprep.subr.mxu0 0.0
      %1373 = vmatpush1.msra.mxu0 0.0
      %1374 = vmatprep.subr.mxu0 0.0
      %1375 = vmatpush1.msra.mxu0 0.0
      %1376 = vmatprep.subr.mxu0 0.0
      %1377 = vmatpush1.msra.mxu0 0.0
      %1378 = vmatprep.subr.mxu0 0.0
      %1379 = vmatpush1.msra.mxu0 0.0
      %1380 = vmatprep.subr.mxu0 0.0
      %1381 = vmatpush1.msra.mxu0 0.0
      %1382 = vmatprep.subr.mxu0 0.0
      %1383 = vmatpush1.msra.mxu0 0.0
      %1384 = vmatprep.subr.mxu0 0.0
      %1385 = vmatpush1.msra.mxu0 0.0
      %1386 = vmatprep.subr.mxu0 0.0
      %1387 = vmatpush1.msra.mxu0 0.0
      %1388 = vmatprep.subr.mxu0 0.0
      %1389 = vmatpush1.msra.mxu0 0.0
      %1390 = vmatprep.subr.mxu0 0.0
      %1391 = vmatpush1.msra.mxu0 0.0
      %1392 = vmatprep.subr.mxu0 0.0
      %1393 = vmatpush1.msra.mxu0 0.0
      %1394 = vmatprep.subr.mxu0 0.0
      %1395 = vmatpush1.msra.mxu0 0.0
      %1396 = vmatprep.mubr.f32.mxu0 0.0
      %1397 = vmatmul.mubr.f32.gmra.mrb[0].mxu0 %v1327
      %v1398 = vpop.f32.mrb[0].mxu0
      %v1399 = vadd.f32 0.0, %v1398
      %v1400 = vpop.f32.mrb[0].mxu0
      %1401 = vmatprep.mubr.f32.mxu0 0.0
      %1402 = vmatmul.mubr.f32.gmra.mrb[0].mxu0 %v1330
      %v1403 = vpop.f32.mrb[0].mxu0
      %v1404 = vadd.f32 0.0, %v1403
      %v1405 = vpop.f32.mrb[0].mxu0
      %1406 = vdwg.mxu0
      %v1407 = vadd.f32 %v582, %v1399
      %v1408 = vadd.f32 %v584, %v1404
      %v1409 = vsel %vm323, %v1407, -inf
      %1410 = vmax.xlane.f32.xlu0 %v1409
      %v1411 = vpop.xlane.xlu0 %1410
      %v1412 = vsel %vm327, %v1408, -inf
      %1413 = vmax.xlane.f32.xlu0 %v1412
      %v1414 = vpop.xlane.xlu0 %1413
      %v1415 = vsub.f32 %v1407, %v1411
      %v1416 = vsub.f32 %v1408, %v1414
      %v1417 = vmul.f32 %v1415, 1.442695
      %v1418 = vpow.pop %v1417
      %v1419 = vmul.f32 %v1416, 1.442695
      %v1420 = vpow.pop %v1419
      %v1421 = vsel %vm323, %v1418, 0.0
      %1422 = vadd.xlane.f32.xlu0 %v1421
      %v1423 = vpop.xlane.xlu0 %1422
      %v1424 = vsel %vm327, %v1420, 0.0
      %1425 = vadd.xlane.f32.xlu0 %v1424
      %v1426 = vpop.xlane.xlu0 %1425
      %v1427 = vrcp.pop %v1423
      %v1428 = vrcp.pop %v1426
      %v1429 = vmul.f32 %v1418, %v1427
      %v1430 = vmul.f32 %v1420, %v1428
      %v1432 = vsel %vm614, %v1430, 0
      %1434 = vmatprep.subr.mxu0 0.0
      %1435 = vmatpush1.msra.mxu0 %v1429
      %1436 = vmatprep.subr.mxu0 0.0
      %1437 = vmatpush1.msra.mxu0 %v1432
      %1438 = vmatprep.subr.mxu0 0.0
      %1439 = vmatpush1.msra.mxu0 0.0
      %1440 = vmatprep.subr.mxu0 0.0
      %1441 = vmatpush1.msra.mxu0 0.0
      %1442 = vmatprep.subr.mxu0 0.0
      %1443 = vmatpush1.msra.mxu0 0.0
      %1444 = vmatprep.subr.mxu0 0.0
      %1445 = vmatpush1.msra.mxu0 0.0
      %1446 = vmatprep.subr.mxu0 0.0
      %1447 = vmatpush1.msra.mxu0 0.0
      %1448 = vmatprep.subr.mxu0 0.0
      %1449 = vmatpush1.msra.mxu0 0.0
      %1450 = vmatprep.subr.mxu0 0.0
      %1451 = vmatpush1.msra.mxu0 0.0
      %1452 = vmatprep.subr.mxu0 0.0
      %1453 = vmatpush1.msra.mxu0 0.0
      %1454 = vmatprep.subr.mxu0 0.0
      %1455 = vmatpush1.msra.mxu0 0.0
      %1456 = vmatprep.subr.mxu0 0.0
      %1457 = vmatpush1.msra.mxu0 0.0
      %1458 = vmatprep.subr.mxu0 0.0
      %1459 = vmatpush1.msra.mxu0 0.0
      %1460 = vmatprep.subr.mxu0 0.0
      %1461 = vmatpush1.msra.mxu0 0.0
      %1462 = vmatprep.subr.mxu0 0.0
      %1463 = vmatpush1.msra.mxu0 0.0
      %1464 = vmatprep.subr.mxu0 0.0
      %1465 = vmatpush1.msra.mxu0 0.0
      %1466 = vmatprep.subr.mxu0 0.0
      %1467 = vmatpush1.msra.mxu0 0.0
      %1468 = vmatprep.subr.mxu0 0.0
      %1469 = vmatpush1.msra.mxu0 0.0
      %1470 = vmatprep.subr.mxu0 0.0
      %1471 = vmatpush1.msra.mxu0 0.0
      %1472 = vmatprep.subr.mxu0 0.0
      %1473 = vmatpush1.msra.mxu0 0.0
      %1474 = vmatprep.subr.mxu0 0.0
      %1475 = vmatpush1.msra.mxu0 0.0
      %1476 = vmatprep.subr.mxu0 0.0
      %1477 = vmatpush1.msra.mxu0 0.0
      %1478 = vmatprep.subr.mxu0 0.0
      %1479 = vmatpush1.msra.mxu0 0.0
      %1480 = vmatprep.subr.mxu0 0.0
      %1481 = vmatpush1.msra.mxu0 0.0
      %1482 = vmatprep.subr.mxu0 0.0
      %1483 = vmatpush1.msra.mxu0 0.0
      %1484 = vmatprep.subr.mxu0 0.0
      %1485 = vmatpush1.msra.mxu0 0.0
      %1486 = vmatprep.subr.mxu0 0.0
      %1487 = vmatpush1.msra.mxu0 0.0
      %1488 = vmatprep.subr.mxu0 0.0
      %1489 = vmatpush1.msra.mxu0 0.0
      %1490 = vmatprep.subr.mxu0 0.0
      %1491 = vmatpush1.msra.mxu0 0.0
      %1492 = vmatprep.subr.mxu0 0.0
      %1493 = vmatpush1.msra.mxu0 0.0
      %1494 = vmatprep.subr.mxu0 0.0
      %1495 = vmatpush1.msra.mxu0 0.0
      %1496 = vmatprep.subr.mxu0 0.0
      %1497 = vmatpush1.msra.mxu0 0.0
      %1498 = vmatprep.mubr.f32.mxu0 0.0
      %1499 = vmatmul.mubr.f32.gmra.mrb[0].mxu0 %v694
      %v1500 = vpop.f32.mrb[0].mxu0
      %v1501 = vadd.f32 0.0, %v1500
      %v1502 = vpop.f32.mrb[0].mxu0
      %1503 = vmatprep.mubr.f32.mxu0 0.0
      %1504 = vmatmul.mubr.f32.gmra.mrb[0].mxu0 %v697
      %v1505 = vpop.f32.mrb[0].mxu0
      %v1506 = vadd.f32 0.0, %v1505
      %v1507 = vpop.f32.mrb[0].mxu0
      %1508 = vdwg.mxu0
      %v1510 = vsel %vm323, %v1501, 0
      %v1513 = vsel %vm323, %v1506, 0
      %1515 = vmatprep.subr.mxu0 0.0
      %1516 = vmatpush1.msra.mxu0 %v318
      %1517 = vmatprep.subr.mxu0 0.0
      %1518 = vmatpush1.msra.mxu0 0.0
      %1519 = vmatprep.subr.mxu0 0.0
      %1520 = vmatpush1.msra.mxu0 0.0
      %1521 = vmatprep.subr.mxu0 0.0
      %1522 = vmatpush1.msra.mxu0 0.0
      %1523 = vmatprep.subr.mxu0 0.0
      %1524 = vmatpush1.msra.mxu0 0.0
      %1525 = vmatprep.subr.mxu0 0.0
      %1526 = vmatpush1.msra.mxu0 0.0
      %1527 = vmatprep.subr.mxu0 0.0
      %1528 = vmatpush1.msra.mxu0 0.0
      %1529 = vmatprep.subr.mxu0 0.0
      %1530 = vmatpush1.msra.mxu0 0.0
      %1531 = vmatprep.subr.mxu0 0.0
      %1532 = vmatpush1.msra.mxu0 0.0
      %1533 = vmatprep.subr.mxu0 0.0
      %1534 = vmatpush1.msra.mxu0 0.0
      %1535 = vmatprep.subr.mxu0 0.0
      %1536 = vmatpush1.msra.mxu0 0.0
      %1537 = vmatprep.subr.mxu0 0.0
      %1538 = vmatpush1.msra.mxu0 0.0
      %1539 = vmatprep.subr.mxu0 0.0
      %1540 = vmatpush1.msra.mxu0 0.0
      %1541 = vmatprep.subr.mxu0 0.0
      %1542 = vmatpush1.msra.mxu0 0.0
      %1543 = vmatprep.subr.mxu0 0.0
      %1544 = vmatpush1.msra.mxu0 0.0
      %1545 = vmatprep.subr.mxu0 0.0
      %1546 = vmatpush1.msra.mxu0 0.0
      %1547 = vmatprep.subr.mxu0 0.0
      %1548 = vmatpush1.msra.mxu0 0.0
      %1549 = vmatprep.subr.mxu0 0.0
      %1550 = vmatpush1.msra.mxu0 0.0
      %1551 = vmatprep.subr.mxu0 0.0
      %1552 = vmatpush1.msra.mxu0 0.0
      %1553 = vmatprep.subr.mxu0 0.0
      %1554 = vmatpush1.msra.mxu0 0.0
      %1555 = vmatprep.subr.mxu0 0.0
      %1556 = vmatpush1.msra.mxu0 0.0
      %1557 = vmatprep.subr.mxu0 0.0
      %1558 = vmatpush1.msra.mxu0 0.0
      %1559 = vmatprep.subr.mxu0 0.0
      %1560 = vmatpush1.msra.mxu0 0.0
      %1561 = vmatprep.subr.mxu0 0.0
      %1562 = vmatpush1.msra.mxu0 0.0
      %1563 = vmatprep.subr.mxu0 0.0
      %1564 = vmatpush1.msra.mxu0 0.0
      %1565 = vmatprep.subr.mxu0 0.0
      %1566 = vmatpush1.msra.mxu0 0.0
      %1567 = vmatprep.subr.mxu0 0.0
      %1568 = vmatpush1.msra.mxu0 0.0
      %1569 = vmatprep.subr.mxu0 0.0
      %1570 = vmatpush1.msra.mxu0 0.0
      %1571 = vmatprep.subr.mxu0 0.0
      %1572 = vmatpush1.msra.mxu0 0.0
      %1573 = vmatprep.subr.mxu0 0.0
      %1574 = vmatpush1.msra.mxu0 0.0
      %1575 = vmatprep.subr.mxu0 0.0
      %1576 = vmatpush1.msra.mxu0 0.0
      %1577 = vmatprep.subr.mxu0 0.0
      %1578 = vmatpush1.msra.mxu0 0.0
      %1579 = vmatprep.mubr.f32.mxu0 0.0
      %1580 = vmatmul.mubr.f32.gmra.mrb[0].mxu0 %v1510
      %v1581 = vpop.f32.mrb[0].mxu0
      %v1582 = vadd.f32 0.0, %v1581
      %v1583 = vpop.f32.mrb[0].mxu0
      %1584 = vmatprep.mubr.f32.mxu0 0.0
      %1585 = vmatmul.mubr.f32.gmra.mrb[0].mxu0 %v1513
      %v1586 = vpop.f32.mrb[0].mxu0
      %v1587 = vadd.f32 0.0, %v1586
      %v1588 = vpop.f32.mrb[0].mxu0
      %1589 = vdwg.mxu0
      %v1590 = vadd.f32 %v582, %v1582
      %v1591 = vadd.f32 %v584, %v1587
      %v1592 = vsel %vm323, %v1590, -inf
      %1593 = vmax.xlane.f32.xlu0 %v1592
      %v1594 = vpop.xlane.xlu0 %1593
      %v1595 = vsel %vm327, %v1591, -inf
      %1596 = vmax.xlane.f32.xlu0 %v1595
      %v1597 = vpop.xlane.xlu0 %1596
      %v1598 = vsub.f32 %v1590, %v1594
      %v1599 = vsub.f32 %v1591, %v1597
      %v1600 = vmul.f32 %v1598, 1.442695
      %v1601 = vpow.pop %v1600
      %v1602 = vmul.f32 %v1599, 1.442695
      %v1603 = vpow.pop %v1602
      %v1604 = vsel %vm323, %v1601, 0.0
      %1605 = vadd.xlane.f32.xlu0 %v1604
      %v1606 = vpop.xlane.xlu0 %1605
      %v1607 = vsel %vm327, %v1603, 0.0
      %1608 = vadd.xlane.f32.xlu0 %v1607
      %v1609 = vpop.xlane.xlu0 %1608
      %v1610 = vrcp.pop %v1606
      %v1611 = vrcp.pop %v1609
      %v1612 = vmul.f32 %v1601, %v1610
      %v1613 = vmul.f32 %v1603, %v1611
      %1614 = vst.msk [vmem:[%s293] sm:$0xff] %vm323, %v1612
      %1615 = vst.msk [vmem:[%s293 + $0x8] sm:$0xf] %vm327, %v1613
      %v1616 = vmul.f32 %v1612, %v306
      %v1617 = vmul.f32 %v1613, %v307
      %v1618 = vsel %vm323, %v1616, 0.0
      %1619 = vadd.xlane.f32.xlu0 %v1618
      %v1620 = vpop.xlane.xlu0 %1619
      %v1621 = vsel %vm327, %v1617, 0.0
      %1622 = vadd.xlane.f32.xlu0 %v1621
      %v1623 = vpop.xlane.xlu0 %1622
      %v1624 = vmul.f32 %v1612, %v309
      %v1625 = vmul.f32 %v1613, %v310
      %v1626 = vsel %vm323, %v1624, 0.0
      %1627 = vadd.xlane.f32.xlu0 %v1626
      %v1628 = vpop.xlane.xlu0 %1627
      %v1629 = vsel %vm327, %v1625, 0.0
      %1630 = vadd.xlane.f32.xlu0 %v1629
      %v1631 = vpop.xlane.xlu0 %1630
      %v1632 = vmul.f32 %v1612, %v312
      %v1633 = vmul.f32 %v1613, %v313
      %v1634 = vsel %vm323, %v1632, 0.0
      %1635 = vadd.xlane.f32.xlu0 %v1634
      %v1636 = vpop.xlane.xlu0 %1635
      %v1637 = vsel %vm327, %v1633, 0.0
      %1638 = vadd.xlane.f32.xlu0 %v1637
      %v1639 = vpop.xlane.xlu0 %1638
      %v1640 = vsel %vm389, %v1620, %v1628
      %v1641 = vsel %vm389, %v1623, %v1631
      %v1642 = vsel %vm392, %v1640, %v1636
      %v1643 = vsel %vm392, %v1641, %v1639
      %v1644 = vmul.f32 %v1642, %v1642
      %v1645 = vmul.f32 %v1643, %v1643
      %v1646 = vsel %vm397, %v1644, 0.0
      %1647 = vadd.xlane.f32.xlu0 %v1646
      %v1648 = vpop.xlane.xlu0 %1647
      %v1649 = vsel %vm401, %v1645, 0.0
      %1650 = vadd.xlane.f32.xlu0 %v1649
      %v1651 = vpop.xlane.xlu0 %1650
      %v1652 = vrsqrt.pop %v1648
      %v1653 = vmul.f32 %v1648, %v1652
      %vm1654 = vcmp.eq.f32.partialorder %v1648, inf
      %v1655 = vsel %vm1654, %v1648, %v1653
      %vm1656 = vcmp.eq.f32.partialorder %v1648, 0.0
      %v1657 = vand.u32 %v1648, 2147483648
      %v1658 = vsel %vm1656, %v1657, %v1655
      %v1659 = vrsqrt.pop %v1651
      %v1660 = vmul.f32 %v1651, %v1659
      %vm1661 = vcmp.eq.f32.partialorder %v1651, inf
      %v1662 = vsel %vm1661, %v1651, %v1660
      %vm1663 = vcmp.eq.f32.partialorder %v1651, 0.0
      %v1664 = vand.u32 %v1651, 2147483648
      %v1665 = vsel %vm1663, %v1664, %v1662
      %v1666 = vadd.f32 %v1658, 1e-12
      %v1667 = vadd.f32 %v1665, 1e-12
      %v1668 = vrcp.pop %v1666
      %v1669 = vrcp.pop %v1667
      %v1670 = vmul.f32 %v1642, %v1668
      %v1671 = vmul.f32 %v1643, %v1669
      %1672 = vst.msk [vmem:[%s298] sm:$0xff] %vm397, %v1670
      %1673 = vst.msk [vmem:[%s298 + $0x8] sm:$0xf] %vm401, %v1671
      %p1674 = scmp.lt.s32.totalorder %s19, 1
      %s1675 = scalar_select %p1674, %s19, 1
      %s1676 = smul.addr %s1675, 2
      %s1677 = smul.addr %s1676, 8
      %s1678 = scalar_lea.vmem %s5, %s1677
      %p1679 = scmp.lt.s32.totalorder %s19, 1
      %s1680 = scalar_select %p1679, %s19, 1
      %s1681 = smul.addr %s1680, 2
      %s1682 = smul.addr %s1681, 8
      %s1683 = scalar_lea.vmem %s6, %s1682
      %p1684 = scmp.lt.s32.totalorder %s19, 1
      %s1685 = scalar_select %p1684, %s19, 1
      %s1686 = smul.addr %s1685, 2
      %s1687 = smul.addr %s1686, 8
      %s1688 = scalar_lea.vmem %s7, %s1687
      // Predicated region
      $region41: #{tpu_custom_call.1} parent=39 // pred_check
        %p1689 = pneg %p147
      $region42: #{tpu_custom_call.1} parent=39 // pred_check_branch
        %1691 = sbr.rel (%p1689) target = $region44
      $region43: #{tpu_custom_call.1} parent=39 // pred_region
        _
      $region44: #{tpu_custom_call.1} parent=39 // pred_fallthru
        _
      // Predicated region
      $region45: #{tpu_custom_call.1} parent=39 // pred_check
        %p1692 = pneg %p173
      $region46: #{tpu_custom_call.1} parent=39 // pred_check_branch
        %1694 = sbr.rel (%p1692) target = $region48
      $region47: #{tpu_custom_call.1} parent=39 // pred_region
        _
      $region48: #{tpu_custom_call.1} parent=39 // pred_fallthru
        _
      // Predicated region
      $region49: #{tpu_custom_call.1} parent=39 // pred_check
        %p1695 = pneg %p199
      $region50: #{tpu_custom_call.1} parent=39 // pred_check_branch
        %1697 = sbr.rel (%p1695) target = $region52
      $region51: #{tpu_custom_call.1} parent=39 // pred_region
        _
      $region52: #{tpu_custom_call.1} parent=39 // pred_fallthru
        _
    $region40: #{tpu_custom_call.1} parent=5 // pred_fallthru
      _
    %p1698 = scmp.le.s32.totalorder 2, %s14
    // Predicated region
    $region53: #{tpu_custom_call.1} parent=5 // pred_check
      %p1699 = pneg %p1698
    $region54: #{tpu_custom_call.1} parent=5 // pred_check_branch
      %1701 = sbr.rel (%p1699) target = $region56
    $region55: #{tpu_custom_call.1} parent=5 // pred_region
      %s1702 = ssub.s32 %s14, 2
      // Predicated region
      $region57: #{tpu_custom_call.1} parent=55 // pred_check
        %p1703 = pneg %p153
      $region58: #{tpu_custom_call.1} parent=55 // pred_check_branch
        %1705 = sbr.rel (%p1703) target = $region60
      $region59: #{tpu_custom_call.1} parent=55 // pred_region
        %p1706 = scmp.lt.s32.totalorder %s20, 1
        %s1707 = scalar_select %p1706, %s20, 1
        %s1708 = smul.addr %s1707, 2
        %s1709 = smul.addr %s1708, 8
        %s1710 = scalar_lea.vmem %s5, %s1709
      $region60: #{tpu_custom_call.1} parent=55 // pred_fallthru
        _
      // Predicated region
      $region61: #{tpu_custom_call.1} parent=55 // pred_check
        %p1711 = pneg %p179
      $region62: #{tpu_custom_call.1} parent=55 // pred_check_branch
        %1713 = sbr.rel (%p1711) target = $region64
      $region63: #{tpu_custom_call.1} parent=55 // pred_region
        %p1714 = scmp.lt.s32.totalorder %s20, 1
        %s1715 = scalar_select %p1714, %s20, 1
        %s1716 = smul.addr %s1715, 2
        %s1717 = smul.addr %s1716, 8
        %s1718 = scalar_lea.vmem %s6, %s1717
      $region64: #{tpu_custom_call.1} parent=55 // pred_fallthru
        _
      // Predicated region
      $region65: #{tpu_custom_call.1} parent=55 // pred_check
        %p1719 = pneg %p205
      $region66: #{tpu_custom_call.1} parent=55 // pred_check_branch
        %1721 = sbr.rel (%p1719) target = $region68
      $region67: #{tpu_custom_call.1} parent=55 // pred_region
        %p1722 = scmp.lt.s32.totalorder %s20, 1
        %s1723 = scalar_select %p1722, %s20, 1
        %s1724 = smul.addr %s1723, 2
        %s1725 = smul.addr %s1724, 8
        %s1726 = scalar_lea.vmem %s7, %s1725
      $region68: #{tpu_custom_call.1} parent=55 // pred_fallthru
        _
    $region56: #{tpu_custom_call.1} parent=5 // pred_fallthru
      _
  $region6: #{tpu_custom_call.1} parent=0 // loop_footer
    %s18 = sadd.s32 1, %s14
  $region7: #{tpu_custom_call.1} parent=0 // loop_footer_branch
    %13 = sbr.rel target = $region3
  $region8: #{tpu_custom_call.1} parent=0 // loop_exit
    _

</llo_original>
